<compile_context>
chip_gen: v7x
topology: tpu7x:2x2x1
jax: 0.10.0
libtpu: 0.0.40
codegen_flags: <defaults>
</compile_context>

<pallas_src>
import jax
import jax.numpy as jnp
from jax.experimental import pallas as pl
from jax.experimental.pallas import tpu as pltpu

HIDDEN = 768  # fixed by nn.Linear(768, 768)


def _round_up(x, m):
    return ((x + m - 1) // m) * m


def adapter_fusion_kernel(x_ref, w_ref, b_ref, r_ref, o_ref):
    # x_ref: (tm, H) token tile in the caller's dtype (cast to bf16 here, not in
    #        a wrapper astype that would round-trip through HBM).
    # w_ref: (H_in, H_out) bf16 weight, pre-transposed; resident in VMEM.
    # b_ref: (1, H) f32 bias; resident.
    # r_ref: (tm, H) residual tile in the caller's dtype.
    # o_ref: (tm, H) output tile.
    x = x_ref[...].astype(w_ref.dtype)                       # VPU cast, free-ish
    y = jnp.dot(x, w_ref[...], preferred_element_type=jnp.float32)
    y = y + b_ref[...] + r_ref[...].astype(jnp.float32)
    o_ref[...] = jnp.maximum(y, 0.0).astype(o_ref.dtype)


def adapter_fusion(x, residual, weight, bias, *, tm=512,
                   compute_dtype=jnp.bfloat16, out_dtype=None):
    """x, residual: (B, S, H). weight: (H_out, H_in) as in PyTorch Linear.
    Returns relu(x @ weight.T + bias + residual) with shape (B, S, H).

    out_dtype defaults to x.dtype; pass jnp.bfloat16 to halve output HBM bytes
    when the downstream consumer tolerates it."""
    B, S, H = x.shape
    assert H == HIDDEN
    M = B * S
    out_dtype = x.dtype if out_dtype is None else out_dtype

    # Tile selection:
    #  - clamp to the 16-aligned problem size for tiny inputs (bf16 packs 16 rows
    #    per packed vreg),
    #  - if M is large but would give < 4 grid steps, shrink tm so v7x's two
    #    TensorCores both get work and DMA/compute overlap survives.
    tm = min(tm, _round_up(M, 16))
    min_steps = 4
    if M > tm and pl.cdiv(M, tm) < min_steps:
        tm = max(16, _round_up(pl.cdiv(M, min_steps), 16))

    x2 = x.reshape(M, H)                    # metadata-only reshape, native dtype
    r2 = residual.reshape(M, H)
    wt = weight.T.astype(compute_dtype)     # one-time (H_in, H_out) bf16 copy
    b2 = bias.reshape(1, H).astype(jnp.float32)

    grid = (pl.cdiv(M, tm),)                # ragged last block handled by Pallas

    out = pl.pallas_call(
        adapter_fusion_kernel,
        out_shape=jax.ShapeDtypeStruct((M, H), out_dtype),
        grid_spec=pltpu.PrefetchScalarGridSpec(
            num_scalar_prefetch=0,
            grid=grid,
            in_specs=[
                pl.BlockSpec((tm, H), lambda i: (i, 0)),   # x tile (native dtype)
                pl.BlockSpec((H, H), lambda i: (0, 0)),    # weight (resident)
                pl.BlockSpec((1, H), lambda i: (0, 0)),    # bias (resident)
                pl.BlockSpec((tm, H), lambda i: (i, 0)),   # residual tile
            ],
            out_specs=pl.BlockSpec((tm, H), lambda i: (i, 0)),
        ),
        compiler_params=pltpu.CompilerParams(
            dimension_semantics=("parallel",)),
    )(x2, wt, b2, r2)

    return out.reshape(B, S, H)


def reference(x, residual, weight, bias):
    y = jnp.einsum("bsh,oh->bso", x, weight) + bias
    return jnp.maximum(y + residual, 0.0)


if __name__ == "__main__":
    key = jax.random.PRNGKey(0)
    k1, k2, k3, k4 = jax.random.split(key, 4)

    B, S, H = 2, 8, HIDDEN
    x = jax.random.normal(k1, (B, S, H), dtype=jnp.float32)
    residual = jax.random.normal(k2, (B, S, H), dtype=jnp.float32)
    # Deterministic parameter init (mimics Linear's uniform init scale).
    bound = 1.0 / (H ** 0.5)
    weight = jax.random.uniform(k3, (H, H), minval=-bound, maxval=bound,
                                dtype=jnp.float32)
    bias = jax.random.uniform(k4, (H,), minval=-bound, maxval=bound,
                              dtype=jnp.float32)

    out = adapter_fusion(x, residual, weight, bias)
    jax.block_until_ready(out)

    ref = reference(x, residual, weight, bias)
    assert out.shape == (B, S, H)
    # bf16 weight / in-kernel bf16 cast of x with f32 accumulation -> relaxed
    # tolerance vs the f32 reference.
    assert jnp.allclose(out, ref, atol=5e-2, rtol=5e-2)

    print("KERNEL_OK")
</pallas_src>

<mosaic_0001>
module attributes {stable_mosaic.version = 11 : i64} {
  func.func @adapter_fusion_kernel(%arg0: i32, %arg1: memref<16x768xf32, #tpu.memory_space<vmem>>, %arg2: memref<768x768xbf16, #tpu.memory_space<vmem>>, %arg3: memref<1x768xf32, #tpu.memory_space<vmem>>, %arg4: memref<16x768xf32, #tpu.memory_space<vmem>>, %arg5: memref<16x768xf32, #tpu.memory_space<vmem>>) attributes {dimension_semantics = [#tpu.dimension_semantics<parallel>], iteration_bounds = array<i64: 1>, scalar_prefetch = 0 : i64, scratch_operands = 0 : i64, tpu.core_type = #tpu.core_type<tc>, window_params = [{transform_indices = @transform_0, window_bounds = array<i64: 16, 768>}, {pipeline_mode = #tpu.pipeline_mode<synchronous>, transform_indices = @transform_1, window_bounds = array<i64: 768, 768>}, {pipeline_mode = #tpu.pipeline_mode<synchronous>, transform_indices = @transform_2, window_bounds = array<i64: 1, 768>}, {transform_indices = @transform_3, window_bounds = array<i64: 16, 768>}, {transform_indices = @transform_4, window_bounds = array<i64: 16, 768>}]} {
    %c0 = arith.constant 0 : index
    %c0_0 = arith.constant 0 : index
    %0 = vector.load %arg1[%c0, %c0_0] : memref<16x768xf32, #tpu.memory_space<vmem>>, vector<16x768xf32>
    %1 = arith.truncf %0 : vector<16x768xf32> to vector<16x768xbf16>
    %c0_1 = arith.constant 0 : index
    %c0_2 = arith.constant 0 : index
    %2 = vector.load %arg2[%c0_1, %c0_2] : memref<768x768xbf16, #tpu.memory_space<vmem>>, vector<768x768xbf16>
    %cst = arith.constant dense<0.000000e+00> : vector<16x768xf32>
    %3 = tpu.matmul %1, %2, %cst {dimension_numbers = #tpu.dot_dimension_numbers<[1], [0], [0], [1], [0, 0, 1, 1], [], []>} : vector<16x768xbf16>, vector<768x768xbf16>, vector<16x768xf32> -> vector<16x768xf32>
    %c0_3 = arith.constant 0 : index
    %c0_4 = arith.constant 0 : index
    %4 = vector.load %arg3[%c0_3, %c0_4] : memref<1x768xf32, #tpu.memory_space<vmem>>, vector<1x768xf32>
    %5 = vector.broadcast %4 : vector<1x768xf32> to vector<16x768xf32>
    %6 = arith.addf %3, %5 : vector<16x768xf32>
    %c0_5 = arith.constant 0 : index
    %c0_6 = arith.constant 0 : index
    %7 = vector.load %arg4[%c0_5, %c0_6] : memref<16x768xf32, #tpu.memory_space<vmem>>, vector<16x768xf32>
    %8 = arith.addf %6, %7 : vector<16x768xf32>
    %cst_7 = arith.constant 0.000000e+00 : f32
    %9 = vector.broadcast %cst_7 : f32 to vector<16x768xf32>
    %10 = arith.maximumf %8, %9 : vector<16x768xf32>
    %c0_8 = arith.constant 0 : index
    %c0_9 = arith.constant 0 : index
    %11 = vector.load %arg5[%c0_8, %c0_9] : memref<16x768xf32, #tpu.memory_space<vmem>>, vector<16x768xf32>
    tpu.vector_store %arg5[%c0_8, %c0_9], %10 {strides = array<i32>} : memref<16x768xf32, #tpu.memory_space<vmem>>, vector<16x768xf32>,
    return
  }
  func.func @transform_0(%arg0: i32) -> (i32, i32) {
    %c0_i32 = arith.constant 0 : i32
    %c0_i32_0 = arith.constant 0 : i32
    return %arg0, %c0_i32 : i32, i32
  }
  func.func @transform_1(%arg0: i32) -> (i32, i32) {
    %c0_i32 = arith.constant 0 : i32
    %c0_i32_0 = arith.constant 0 : i32
    %c0_i32_1 = arith.constant 0 : i32
    return %c0_i32, %c0_i32_0 : i32, i32
  }
  func.func @transform_2(%arg0: i32) -> (i32, i32) {
    %c0_i32 = arith.constant 0 : i32
    %c0_i32_0 = arith.constant 0 : i32
    %c0_i32_1 = arith.constant 0 : i32
    return %c0_i32, %c0_i32_0 : i32, i32
  }
  func.func @transform_3(%arg0: i32) -> (i32, i32) {
    %c0_i32 = arith.constant 0 : i32
    %c0_i32_0 = arith.constant 0 : i32
    return %arg0, %c0_i32 : i32, i32
  }
  func.func @transform_4(%arg0: i32) -> (i32, i32) {
    %c0_i32 = arith.constant 0 : i32
    %c0_i32_0 = arith.constant 0 : i32
    return %arg0, %c0_i32 : i32, i32
  }
}

</mosaic_0001>

<llo_original>
// kernel: tpu_custom_call.1
$region0: #{tpu_custom_call.1}
  #allocation0 [shape = 'u32[]', space=smem, size = 0x4, offset = 0x4, fixed_abs, tag = 'smem constant byte address 0x4 - core index']
  #allocation1 [shape = 'u32[144,128]{1,0:T(1,128)}', space=vmem, size = 0x12000, scoped, tag = 'internal scratch']
  %s0 = inlined_call_operand.hbm [shape: f32[16,768], index: 0, kind: input, shape index: {}]
  %s1 = inlined_call_operand.hbm [shape: bf16[768,768], index: 1, kind: input, shape index: {}]
  %s2 = inlined_call_operand.hbm [shape: f32[1,768], index: 2, kind: input, shape index: {}]
  %s3 = inlined_call_operand.hbm [shape: f32[16,768], index: 3, kind: input, shape index: {}]
  %s4 = inlined_call_operand.hbm [shape: f32[16,768], index: 4, kind: output, shape index: {}]
  %s5 = sld [smem:[#allocation0]]
  $region42: #{tpu_custom_call.1} parent=0
    _
  %s7 = ssub.s32 1, %s5
  %s8 = scalar_select 0, %s7, %s5
  $region1: #{tpu_custom_call.1} parent=0
    #allocation2 [shape = 'u8[49152]{0}', space=vmem, size = 0xc000, scoped, tag = 'input window, operand 0, single buffered']
    #allocation3 [shape = 's32[1]{0}', space=sflag, size = 0x4, scoped, tag = 'scoped memory for tpu_custom_call.1']
    #allocation4 [shape = 's32[1]{0}', space=sflag, size = 0x4, scoped, tag = 'scoped memory for tpu_custom_call.1']
    #allocation5 [shape = 'u8[1179648]{0}', space=vmem, size = 0x120000, scoped, tag = 'input window, operand 1, single buffered']
    #allocation6 [shape = 's32[1]{0}', space=sflag, size = 0x4, scoped, tag = 'scoped memory for tpu_custom_call.1']
    #allocation7 [shape = 'u8[3072]{0}', space=vmem, size = 0xc00, scoped, tag = 'input window, operand 2, single buffered']
    #allocation8 [shape = 'u8[49152]{0}', space=vmem, size = 0xc000, scoped, tag = 'input window, operand 3, single buffered']
    #allocation9 [shape = 's32[1]{0}', space=sflag, size = 0x4, scoped, tag = 'scoped memory for tpu_custom_call.1']
    #allocation10 [shape = 'u8[49152]{0}', space=vmem, size = 0xc000, scoped, tag = 'output window, operand 0, single buffered']
    %9 = vsyncpa [#allocation3], 0
    %10 = vsyncpa [#allocation6], 0
    %11 = vsyncpa [#allocation9], 0
    %12 = vsyncpa [#allocation4], 0
    // Predicated region
    $region2: #{tpu_custom_call.1} parent=1 // pred_check
      _
    $region3: #{tpu_custom_call.1} parent=1 // pred_check_branch
      %14 = sbr.rel (0) target = $region5
    $region4: #{tpu_custom_call.1} parent=1 // pred_region
      %s16 = ssub.s32 1536, 1536
      %17 = vsyncadd [#allocation3], %s16
      %s18 = sshll.u32 [#allocation2], 4
      %s19 = int_to_ptr.vmem [resolvable:$true] %s18
      %24 = dma.hbm_to_vmem [thread:$0]  %s0, 1536, %s19, [#allocation3], 768, 768, 48
    $region5: #{tpu_custom_call.1} parent=1 // pred_fallthru
      _
    // Predicated region
    $region6: #{tpu_custom_call.1} parent=1 // pred_check
      _
    $region7: #{tpu_custom_call.1} parent=1 // pred_check_branch
      %26 = sbr.rel (0) target = $region9
    $region8: #{tpu_custom_call.1} parent=1 // pred_region
      %s28 = ssub.s32 36864, 36864
      %29 = vsyncadd [#allocation6], %s28
      %s30 = sshll.u32 [#allocation5], 4
      %s31 = int_to_ptr.vmem [resolvable:$true] %s30
      %36 = dma.hbm_to_vmem [thread:$0]  %s1, 36864, %s31, [#allocation6], 384, 384, 24
    $region9: #{tpu_custom_call.1} parent=1 // pred_fallthru
      _
    // Predicated region
    $region10: #{tpu_custom_call.1} parent=1 // pred_check
      _
    $region11: #{tpu_custom_call.1} parent=1 // pred_check_branch
      %38 = sbr.rel (0) target = $region13
    $region12: #{tpu_custom_call.1} parent=1 // pred_region
      %s40 = ssub.s32 96, 96
      %41 = vsyncadd [#allocation6], %s40
      %s43 = sshll.u32 [#allocation7], 4
      %s44 = int_to_ptr.vmem [resolvable:$true] %s43
      %46 = dma.hbm_to_vmem [thread:$0]  %s2, 96, %s44, [#allocation6]
    $region13: #{tpu_custom_call.1} parent=1 // pred_fallthru
      _
    // Predicated region
    $region14: #{tpu_custom_call.1} parent=1 // pred_check
      _
    $region15: #{tpu_custom_call.1} parent=1 // pred_check_branch
      %48 = sbr.rel (0) target = $region17
    $region16: #{tpu_custom_call.1} parent=1 // pred_region
      %s50 = ssub.s32 1536, 1536
      %51 = vsyncadd [#allocation9], %s50
      %s52 = sshll.u32 [#allocation8], 4
      %s53 = int_to_ptr.vmem [resolvable:$true] %s52
      %58 = dma.hbm_to_vmem [thread:$0]  %s3, 1536, %s53, [#allocation9], 768, 768, 48
    $region17: #{tpu_custom_call.1} parent=1 // pred_fallthru
      _
    // Predicated region
    $region18: #{tpu_custom_call.1} parent=1 // pred_check
      _
    $region19: #{tpu_custom_call.1} parent=1 // pred_check_branch
      %60 = sbr.rel (0) target = $region21
    $region20: #{tpu_custom_call.1} parent=1 // pred_region
      %61 = dma.done [#allocation3], 1536
    $region21: #{tpu_custom_call.1} parent=1 // pred_fallthru
      _
    // Predicated region
    $region22: #{tpu_custom_call.1} parent=1 // pred_check
      _
    $region23: #{tpu_custom_call.1} parent=1 // pred_check_branch
      %63 = sbr.rel (0) target = $region25
    $region24: #{tpu_custom_call.1} parent=1 // pred_region
      %64 = dma.done [#allocation6], 36864
    $region25: #{tpu_custom_call.1} parent=1 // pred_fallthru
      _
    // Predicated region
    $region26: #{tpu_custom_call.1} parent=1 // pred_check
      _
    $region27: #{tpu_custom_call.1} parent=1 // pred_check_branch
      %66 = sbr.rel (0) target = $region29
    $region28: #{tpu_custom_call.1} parent=1 // pred_region
      %67 = dma.done [#allocation6], 96
    $region29: #{tpu_custom_call.1} parent=1 // pred_fallthru
      _
    // Predicated region
    $region30: #{tpu_custom_call.1} parent=1 // pred_check
      _
    $region31: #{tpu_custom_call.1} parent=1 // pred_check_branch
      %69 = sbr.rel (0) target = $region33
    $region32: #{tpu_custom_call.1} parent=1 // pred_region
      %70 = dma.done [#allocation9], 1536
    $region33: #{tpu_custom_call.1} parent=1 // pred_fallthru
      _
    %v71 = vld [vmem:[#allocation2] sm:$0xff]
    %v72 = vld [vmem:[#allocation2 + $0x8] sm:$0xff]
    %v73 = vld [vmem:[#allocation2 + $0x10] sm:$0xff]
    %v74 = vld [vmem:[#allocation2 + $0x18] sm:$0xff]
    %v75 = vld [vmem:[#allocation2 + $0x20] sm:$0xff]
    %v76 = vld [vmem:[#allocation2 + $0x28] sm:$0xff]
    %v77 = vld [vmem:[#allocation2 + $0x30] sm:$0xff]
    %v78 = vld [vmem:[#allocation2 + $0x38] sm:$0xff]
    %v79 = vld [vmem:[#allocation2 + $0x40] sm:$0xff]
    %v80 = vld [vmem:[#allocation2 + $0x48] sm:$0xff]
    %v81 = vld [vmem:[#allocation2 + $0x50] sm:$0xff]
    %v82 = vld [vmem:[#allocation2 + $0x58] sm:$0xff]
    %v83 = vpack.c.bf16 %v77, %v71
    %v84 = vpack.c.bf16 %v78, %v72
    %v85 = vpack.c.bf16 %v79, %v73
    %v86 = vpack.c.bf16 %v80, %v74
    %v87 = vpack.c.bf16 %v81, %v75
    %v88 = vpack.c.bf16 %v82, %v76
    %v89 = vld [vmem:[#allocation5] sm:$0xff]
    %v90 = vld [vmem:[#allocation5 + $0x8] sm:$0xff]
    %v91 = vld [vmem:[#allocation5 + $0x10] sm:$0xff]
    %v92 = vld [vmem:[#allocation5 + $0x18] sm:$0xff]
    %v93 = vld [vmem:[#allocation5 + $0x20] sm:$0xff]
    %v94 = vld [vmem:[#allocation5 + $0x28] sm:$0xff]
    %v95 = vld [vmem:[#allocation5 + $0x30] sm:$0xff]
    %v96 = vld [vmem:[#allocation5 + $0x38] sm:$0xff]
    %v97 = vld [vmem:[#allocation5 + $0x40] sm:$0xff]
    %v98 = vld [vmem:[#allocation5 + $0x48] sm:$0xff]
    %v99 = vld [vmem:[#allocation5 + $0x50] sm:$0xff]
    %v100 = vld [vmem:[#allocation5 + $0x58] sm:$0xff]
    %v101 = vld [vmem:[#allocation5 + $0x60] sm:$0xff]
    %v102 = vld [vmem:[#allocation5 + $0x68] sm:$0xff]
    %v103 = vld [vmem:[#allocation5 + $0x70] sm:$0xff]
    %v104 = vld [vmem:[#allocation5 + $0x78] sm:$0xff]
    %v105 = vld [vmem:[#allocation5 + $0x80] sm:$0xff]
    %v106 = vld [vmem:[#allocation5 + $0x88] sm:$0xff]
    %v107 = vld [vmem:[#allocation5 + $0x90] sm:$0xff]
    %v108 = vld [vmem:[#allocation5 + $0x98] sm:$0xff]
    %v109 = vld [vmem:[#allocation5 + $0xa0] sm:$0xff]
    %v110 = vld [vmem:[#allocation5 + $0xa8] sm:$0xff]
    %v111 = vld [vmem:[#allocation5 + $0xb0] sm:$0xff]
    %v112 = vld [vmem:[#allocation5 + $0xb8] sm:$0xff]
    %v113 = vld [vmem:[#allocation5 + $0xc0] sm:$0xff]
    %v114 = vld [vmem:[#allocation5 + $0xc8] sm:$0xff]
    %v115 = vld [vmem:[#allocation5 + $0xd0] sm:$0xff]
    %v116 = vld [vmem:[#allocation5 + $0xd8] sm:$0xff]
    %v117 = vld [vmem:[#allocation5 + $0xe0] sm:$0xff]
    %v118 = vld [vmem:[#allocation5 + $0xe8] sm:$0xff]
    %v119 = vld [vmem:[#allocation5 + $0xf0] sm:$0xff]
    %v120 = vld [vmem:[#allocation5 + $0xf8] sm:$0xff]
    %v121 = vld [vmem:[#allocation5 + $0x100] sm:$0xff]
    %v122 = vld [vmem:[#allocation5 + $0x108] sm:$0xff]
    %v123 = vld [vmem:[#allocation5 + $0x110] sm:$0xff]
    %v124 = vld [vmem:[#allocation5 + $0x118] sm:$0xff]
    %v125 = vld [vmem:[#allocation5 + $0x120] sm:$0xff]
    %v126 = vld [vmem:[#allocation5 + $0x128] sm:$0xff]
    %v127 = vld [vmem:[#allocation5 + $0x130] sm:$0xff]
    %v128 = vld [vmem:[#allocation5 + $0x138] sm:$0xff]
    %v129 = vld [vmem:[#allocation5 + $0x140] sm:$0xff]
    %v130 = vld [vmem:[#allocation5 + $0x148] sm:$0xff]
    %v131 = vld [vmem:[#allocation5 + $0x150] sm:$0xff]
    %v132 = vld [vmem:[#allocation5 + $0x158] sm:$0xff]
    %v133 = vld [vmem:[#allocation5 + $0x160] sm:$0xff]
    %v134 = vld [vmem:[#allocation5 + $0x168] sm:$0xff]
    %v135 = vld [vmem:[#allocation5 + $0x170] sm:$0xff]
    %v136 = vld [vmem:[#allocation5 + $0x178] sm:$0xff]
    %v137 = vld [vmem:[#allocation5 + $0x180] sm:$0xff]
    %v138 = vld [vmem:[#allocation5 + $0x188] sm:$0xff]
    %v139 = vld [vmem:[#allocation5 + $0x190] sm:$0xff]
    %v140 = vld [vmem:[#allocation5 + $0x198] sm:$0xff]
    %v141 = vld [vmem:[#allocation5 + $0x1a0] sm:$0xff]
    %v142 = vld [vmem:[#allocation5 + $0x1a8] sm:$0xff]
    %v143 = vld [vmem:[#allocation5 + $0x1b0] sm:$0xff]
    %v144 = vld [vmem:[#allocation5 + $0x1b8] sm:$0xff]
    %v145 = vld [vmem:[#allocation5 + $0x1c0] sm:$0xff]
    %v146 = vld [vmem:[#allocation5 + $0x1c8] sm:$0xff]
    %v147 = vld [vmem:[#allocation5 + $0x1d0] sm:$0xff]
    %v148 = vld [vmem:[#allocation5 + $0x1d8] sm:$0xff]
    %v149 = vld [vmem:[#allocation5 + $0x1e0] sm:$0xff]
    %v150 = vld [vmem:[#allocation5 + $0x1e8] sm:$0xff]
    %v151 = vld [vmem:[#allocation5 + $0x1f0] sm:$0xff]
    %v152 = vld [vmem:[#allocation5 + $0x1f8] sm:$0xff]
    %v153 = vld [vmem:[#allocation5 + $0x200] sm:$0xff]
    %v154 = vld [vmem:[#allocation5 + $0x208] sm:$0xff]
    %v155 = vld [vmem:[#allocation5 + $0x210] sm:$0xff]
    %v156 = vld [vmem:[#allocation5 + $0x218] sm:$0xff]
    %v157 = vld [vmem:[#allocation5 + $0x220] sm:$0xff]
    %v158 = vld [vmem:[#allocation5 + $0x228] sm:$0xff]
    %v159 = vld [vmem:[#allocation5 + $0x230] sm:$0xff]
    %v160 = vld [vmem:[#allocation5 + $0x238] sm:$0xff]
    %v161 = vld [vmem:[#allocation5 + $0x240] sm:$0xff]
    %v162 = vld [vmem:[#allocation5 + $0x248] sm:$0xff]
    %v163 = vld [vmem:[#allocation5 + $0x250] sm:$0xff]
    %v164 = vld [vmem:[#allocation5 + $0x258] sm:$0xff]
    %v165 = vld [vmem:[#allocation5 + $0x260] sm:$0xff]
    %v166 = vld [vmem:[#allocation5 + $0x268] sm:$0xff]
    %v167 = vld [vmem:[#allocation5 + $0x270] sm:$0xff]
    %v168 = vld [vmem:[#allocation5 + $0x278] sm:$0xff]
    %v169 = vld [vmem:[#allocation5 + $0x280] sm:$0xff]
    %v170 = vld [vmem:[#allocation5 + $0x288] sm:$0xff]
    %v171 = vld [vmem:[#allocation5 + $0x290] sm:$0xff]
    %v172 = vld [vmem:[#allocation5 + $0x298] sm:$0xff]
    %v173 = vld [vmem:[#allocation5 + $0x2a0] sm:$0xff]
    %v174 = vld [vmem:[#allocation5 + $0x2a8] sm:$0xff]
    %v175 = vld [vmem:[#allocation5 + $0x2b0] sm:$0xff]
    %v176 = vld [vmem:[#allocation5 + $0x2b8] sm:$0xff]
    %v177 = vld [vmem:[#allocation5 + $0x2c0] sm:$0xff]
    %v178 = vld [vmem:[#allocation5 + $0x2c8] sm:$0xff]
    %v179 = vld [vmem:[#allocation5 + $0x2d0] sm:$0xff]
    %v180 = vld [vmem:[#allocation5 + $0x2d8] sm:$0xff]
    %v181 = vld [vmem:[#allocation5 + $0x2e0] sm:$0xff]
    %v182 = vld [vmem:[#allocation5 + $0x2e8] sm:$0xff]
    %v183 = vld [vmem:[#allocation5 + $0x2f0] sm:$0xff]
    %v184 = vld [vmem:[#allocation5 + $0x2f8] sm:$0xff]
    %v185 = vld [vmem:[#allocation5 + $0x300] sm:$0xff]
    %v186 = vld [vmem:[#allocation5 + $0x308] sm:$0xff]
    %v187 = vld [vmem:[#allocation5 + $0x310] sm:$0xff]
    %v188 = vld [vmem:[#allocation5 + $0x318] sm:$0xff]
    %v189 = vld [vmem:[#allocation5 + $0x320] sm:$0xff]
    %v190 = vld [vmem:[#allocation5 + $0x328] sm:$0xff]
    %v191 = vld [vmem:[#allocation5 + $0x330] sm:$0xff]
    %v192 = vld [vmem:[#allocation5 + $0x338] sm:$0xff]
    %v193 = vld [vmem:[#allocation5 + $0x340] sm:$0xff]
    %v194 = vld [vmem:[#allocation5 + $0x348] sm:$0xff]
    %v195 = vld [vmem:[#allocation5 + $0x350] sm:$0xff]
    %v196 = vld [vmem:[#allocation5 + $0x358] sm:$0xff]
    %v197 = vld [vmem:[#allocation5 + $0x360] sm:$0xff]
    %v198 = vld [vmem:[#allocation5 + $0x368] sm:$0xff]
    %v199 = vld [vmem:[#allocation5 + $0x370] sm:$0xff]
    %v200 = vld [vmem:[#allocation5 + $0x378] sm:$0xff]
    %v201 = vld [vmem:[#allocation5 + $0x380] sm:$0xff]
    %v202 = vld [vmem:[#allocation5 + $0x388] sm:$0xff]
    %v203 = vld [vmem:[#allocation5 + $0x390] sm:$0xff]
    %v204 = vld [vmem:[#allocation5 + $0x398] sm:$0xff]
    %v205 = vld [vmem:[#allocation5 + $0x3a0] sm:$0xff]
    %v206 = vld [vmem:[#allocation5 + $0x3a8] sm:$0xff]
    %v207 = vld [vmem:[#allocation5 + $0x3b0] sm:$0xff]
    %v208 = vld [vmem:[#allocation5 + $0x3b8] sm:$0xff]
    %v209 = vld [vmem:[#allocation5 + $0x3c0] sm:$0xff]
    %v210 = vld [vmem:[#allocation5 + $0x3c8] sm:$0xff]
    %v211 = vld [vmem:[#allocation5 + $0x3d0] sm:$0xff]
    %v212 = vld [vmem:[#allocation5 + $0x3d8] sm:$0xff]
    %v213 = vld [vmem:[#allocation5 + $0x3e0] sm:$0xff]
    %v214 = vld [vmem:[#allocation5 + $0x3e8] sm:$0xff]
    %v215 = vld [vmem:[#allocation5 + $0x3f0] sm:$0xff]
    %v216 = vld [vmem:[#allocation5 + $0x3f8] sm:$0xff]
    %v217 = vld [vmem:[#allocation5 + $0x400] sm:$0xff]
    %v218 = vld [vmem:[#allocation5 + $0x408] sm:$0xff]
    %v219 = vld [vmem:[#allocation5 + $0x410] sm:$0xff]
    %v220 = vld [vmem:[#allocation5 + $0x418] sm:$0xff]
    %v221 = vld [vmem:[#allocation5 + $0x420] sm:$0xff]
    %v222 = vld [vmem:[#allocation5 + $0x428] sm:$0xff]
    %v223 = vld [vmem:[#allocation5 + $0x430] sm:$0xff]
    %v224 = vld [vmem:[#allocation5 + $0x438] sm:$0xff]
    %v225 = vld [vmem:[#allocation5 + $0x440] sm:$0xff]
    %v226 = vld [vmem:[#allocation5 + $0x448] sm:$0xff]
    %v227 = vld [vmem:[#allocation5 + $0x450] sm:$0xff]
    %v228 = vld [vmem:[#allocation5 + $0x458] sm:$0xff]
    %v229 = vld [vmem:[#allocation5 + $0x460] sm:$0xff]
    %v230 = vld [vmem:[#allocation5 + $0x468] sm:$0xff]
    %v231 = vld [vmem:[#allocation5 + $0x470] sm:$0xff]
    %v232 = vld [vmem:[#allocation5 + $0x478] sm:$0xff]
    %v233 = vld [vmem:[#allocation5 + $0x480] sm:$0xff]
    %v234 = vld [vmem:[#allocation5 + $0x488] sm:$0xff]
    %v235 = vld [vmem:[#allocation5 + $0x490] sm:$0xff]
    %v236 = vld [vmem:[#allocation5 + $0x498] sm:$0xff]
    %v237 = vld [vmem:[#allocation5 + $0x4a0] sm:$0xff]
    %v238 = vld [vmem:[#allocation5 + $0x4a8] sm:$0xff]
    %v239 = vld [vmem:[#allocation5 + $0x4b0] sm:$0xff]
    %v240 = vld [vmem:[#allocation5 + $0x4b8] sm:$0xff]
    %v241 = vld [vmem:[#allocation5 + $0x4c0] sm:$0xff]
    %v242 = vld [vmem:[#allocation5 + $0x4c8] sm:$0xff]
    %v243 = vld [vmem:[#allocation5 + $0x4d0] sm:$0xff]
    %v244 = vld [vmem:[#allocation5 + $0x4d8] sm:$0xff]
    %v245 = vld [vmem:[#allocation5 + $0x4e0] sm:$0xff]
    %v246 = vld [vmem:[#allocation5 + $0x4e8] sm:$0xff]
    %v247 = vld [vmem:[#allocation5 + $0x4f0] sm:$0xff]
    %v248 = vld [vmem:[#allocation5 + $0x4f8] sm:$0xff]
    %v249 = vld [vmem:[#allocation5 + $0x500] sm:$0xff]
    %v250 = vld [vmem:[#allocation5 + $0x508] sm:$0xff]
    %v251 = vld [vmem:[#allocation5 + $0x510] sm:$0xff]
    %v252 = vld [vmem:[#allocation5 + $0x518] sm:$0xff]
    %v253 = vld [vmem:[#allocation5 + $0x520] sm:$0xff]
    %v254 = vld [vmem:[#allocation5 + $0x528] sm:$0xff]
    %v255 = vld [vmem:[#allocation5 + $0x530] sm:$0xff]
    %v256 = vld [vmem:[#allocation5 + $0x538] sm:$0xff]
    %v257 = vld [vmem:[#allocation5 + $0x540] sm:$0xff]
    %v258 = vld [vmem:[#allocation5 + $0x548] sm:$0xff]
    %v259 = vld [vmem:[#allocation5 + $0x550] sm:$0xff]
    %v260 = vld [vmem:[#allocation5 + $0x558] sm:$0xff]
    %v261 = vld [vmem:[#allocation5 + $0x560] sm:$0xff]
    %v262 = vld [vmem:[#allocation5 + $0x568] sm:$0xff]
    %v263 = vld [vmem:[#allocation5 + $0x570] sm:$0xff]
    %v264 = vld [vmem:[#allocation5 + $0x578] sm:$0xff]
    %v265 = vld [vmem:[#allocation5 + $0x580] sm:$0xff]
    %v266 = vld [vmem:[#allocation5 + $0x588] sm:$0xff]
    %v267 = vld [vmem:[#allocation5 + $0x590] sm:$0xff]
    %v268 = vld [vmem:[#allocation5 + $0x598] sm:$0xff]
    %v269 = vld [vmem:[#allocation5 + $0x5a0] sm:$0xff]
    %v270 = vld [vmem:[#allocation5 + $0x5a8] sm:$0xff]
    %v271 = vld [vmem:[#allocation5 + $0x5b0] sm:$0xff]
    %v272 = vld [vmem:[#allocation5 + $0x5b8] sm:$0xff]
    %v273 = vld [vmem:[#allocation5 + $0x5c0] sm:$0xff]
    %v274 = vld [vmem:[#allocation5 + $0x5c8] sm:$0xff]
    %v275 = vld [vmem:[#allocation5 + $0x5d0] sm:$0xff]
    %v276 = vld [vmem:[#allocation5 + $0x5d8] sm:$0xff]
    %v277 = vld [vmem:[#allocation5 + $0x5e0] sm:$0xff]
    %v278 = vld [vmem:[#allocation5 + $0x5e8] sm:$0xff]
    %v279 = vld [vmem:[#allocation5 + $0x5f0] sm:$0xff]
    %v280 = vld [vmem:[#allocation5 + $0x5f8] sm:$0xff]
    %v281 = vld [vmem:[#allocation5 + $0x600] sm:$0xff]
    %v282 = vld [vmem:[#allocation5 + $0x608] sm:$0xff]
    %v283 = vld [vmem:[#allocation5 + $0x610] sm:$0xff]
    %v284 = vld [vmem:[#allocation5 + $0x618] sm:$0xff]
    %v285 = vld [vmem:[#allocation5 + $0x620] sm:$0xff]
    %v286 = vld [vmem:[#allocation5 + $0x628] sm:$0xff]
    %v287 = vld [vmem:[#allocation5 + $0x630] sm:$0xff]
    %v288 = vld [vmem:[#allocation5 + $0x638] sm:$0xff]
    %v289 = vld [vmem:[#allocation5 + $0x640] sm:$0xff]
    %v290 = vld [vmem:[#allocation5 + $0x648] sm:$0xff]
    %v291 = vld [vmem:[#allocation5 + $0x650] sm:$0xff]
    %v292 = vld [vmem:[#allocation5 + $0x658] sm:$0xff]
    %v293 = vld [vmem:[#allocation5 + $0x660] sm:$0xff]
    %v294 = vld [vmem:[#allocation5 + $0x668] sm:$0xff]
    %v295 = vld [vmem:[#allocation5 + $0x670] sm:$0xff]
    %v296 = vld [vmem:[#allocation5 + $0x678] sm:$0xff]
    %v297 = vld [vmem:[#allocation5 + $0x680] sm:$0xff]
    %v298 = vld [vmem:[#allocation5 + $0x688] sm:$0xff]
    %v299 = vld [vmem:[#allocation5 + $0x690] sm:$0xff]
    %v300 = vld [vmem:[#allocation5 + $0x698] sm:$0xff]
    %v301 = vld [vmem:[#allocation5 + $0x6a0] sm:$0xff]
    %v302 = vld [vmem:[#allocation5 + $0x6a8] sm:$0xff]
    %v303 = vld [vmem:[#allocation5 + $0x6b0] sm:$0xff]
    %v304 = vld [vmem:[#allocation5 + $0x6b8] sm:$0xff]
    %v305 = vld [vmem:[#allocation5 + $0x6c0] sm:$0xff]
    %v306 = vld [vmem:[#allocation5 + $0x6c8] sm:$0xff]
    %v307 = vld [vmem:[#allocation5 + $0x6d0] sm:$0xff]
    %v308 = vld [vmem:[#allocation5 + $0x6d8] sm:$0xff]
    %v309 = vld [vmem:[#allocation5 + $0x6e0] sm:$0xff]
    %v310 = vld [vmem:[#allocation5 + $0x6e8] sm:$0xff]
    %v311 = vld [vmem:[#allocation5 + $0x6f0] sm:$0xff]
    %v312 = vld [vmem:[#allocation5 + $0x6f8] sm:$0xff]
    %v313 = vld [vmem:[#allocation5 + $0x700] sm:$0xff]
    %v314 = vld [vmem:[#allocation5 + $0x708] sm:$0xff]
    %v315 = vld [vmem:[#allocation5 + $0x710] sm:$0xff]
    %v316 = vld [vmem:[#allocation5 + $0x718] sm:$0xff]
    %v317 = vld [vmem:[#allocation5 + $0x720] sm:$0xff]
    %v318 = vld [vmem:[#allocation5 + $0x728] sm:$0xff]
    %v319 = vld [vmem:[#allocation5 + $0x730] sm:$0xff]
    %v320 = vld [vmem:[#allocation5 + $0x738] sm:$0xff]
    %v321 = vld [vmem:[#allocation5 + $0x740] sm:$0xff]
    %v322 = vld [vmem:[#allocation5 + $0x748] sm:$0xff]
    %v323 = vld [vmem:[#allocation5 + $0x750] sm:$0xff]
    %v324 = vld [vmem:[#allocation5 + $0x758] sm:$0xff]
    %v325 = vld [vmem:[#allocation5 + $0x760] sm:$0xff]
    %v326 = vld [vmem:[#allocation5 + $0x768] sm:$0xff]
    %v327 = vld [vmem:[#allocation5 + $0x770] sm:$0xff]
    %v328 = vld [vmem:[#allocation5 + $0x778] sm:$0xff]
    %v329 = vld [vmem:[#allocation5 + $0x780] sm:$0xff]
    %v330 = vld [vmem:[#allocation5 + $0x788] sm:$0xff]
    %v331 = vld [vmem:[#allocation5 + $0x790] sm:$0xff]
    %v332 = vld [vmem:[#allocation5 + $0x798] sm:$0xff]
    %v333 = vld [vmem:[#allocation5 + $0x7a0] sm:$0xff]
    %v334 = vld [vmem:[#allocation5 + $0x7a8] sm:$0xff]
    %v335 = vld [vmem:[#allocation5 + $0x7b0] sm:$0xff]
    %v336 = vld [vmem:[#allocation5 + $0x7b8] sm:$0xff]
    %v337 = vld [vmem:[#allocation5 + $0x7c0] sm:$0xff]
    %v338 = vld [vmem:[#allocation5 + $0x7c8] sm:$0xff]
    %v339 = vld [vmem:[#allocation5 + $0x7d0] sm:$0xff]
    %v340 = vld [vmem:[#allocation5 + $0x7d8] sm:$0xff]
    %v341 = vld [vmem:[#allocation5 + $0x7e0] sm:$0xff]
    %v342 = vld [vmem:[#allocation5 + $0x7e8] sm:$0xff]
    %v343 = vld [vmem:[#allocation5 + $0x7f0] sm:$0xff]
    %v344 = vld [vmem:[#allocation5 + $0x7f8] sm:$0xff]
    %v345 = vld [vmem:[#allocation5 + $0x800] sm:$0xff]
    %v346 = vld [vmem:[#allocation5 + $0x808] sm:$0xff]
    %v347 = vld [vmem:[#allocation5 + $0x810] sm:$0xff]
    %v348 = vld [vmem:[#allocation5 + $0x818] sm:$0xff]
    %v349 = vld [vmem:[#allocation5 + $0x820] sm:$0xff]
    %v350 = vld [vmem:[#allocation5 + $0x828] sm:$0xff]
    %v351 = vld [vmem:[#allocation5 + $0x830] sm:$0xff]
    %v352 = vld [vmem:[#allocation5 + $0x838] sm:$0xff]
    %v353 = vld [vmem:[#allocation5 + $0x840] sm:$0xff]
    %v354 = vld [vmem:[#allocation5 + $0x848] sm:$0xff]
    %v355 = vld [vmem:[#allocation5 + $0x850] sm:$0xff]
    %v356 = vld [vmem:[#allocation5 + $0x858] sm:$0xff]
    %v357 = vld [vmem:[#allocation5 + $0x860] sm:$0xff]
    %v358 = vld [vmem:[#allocation5 + $0x868] sm:$0xff]
    %v359 = vld [vmem:[#allocation5 + $0x870] sm:$0xff]
    %v360 = vld [vmem:[#allocation5 + $0x878] sm:$0xff]
    %v361 = vld [vmem:[#allocation5 + $0x880] sm:$0xff]
    %v362 = vld [vmem:[#allocation5 + $0x888] sm:$0xff]
    %v363 = vld [vmem:[#allocation5 + $0x890] sm:$0xff]
    %v364 = vld [vmem:[#allocation5 + $0x898] sm:$0xff]
    %v365 = vld [vmem:[#allocation5 + $0x8a0] sm:$0xff]
    %v366 = vld [vmem:[#allocation5 + $0x8a8] sm:$0xff]
    %v367 = vld [vmem:[#allocation5 + $0x8b0] sm:$0xff]
    %v368 = vld [vmem:[#allocation5 + $0x8b8] sm:$0xff]
    %v369 = vld [vmem:[#allocation5 + $0x8c0] sm:$0xff]
    %v370 = vld [vmem:[#allocation5 + $0x8c8] sm:$0xff]
    %v371 = vld [vmem:[#allocation5 + $0x8d0] sm:$0xff]
    %v372 = vld [vmem:[#allocation5 + $0x8d8] sm:$0xff]
    %v373 = vld [vmem:[#allocation5 + $0x8e0] sm:$0xff]
    %v374 = vld [vmem:[#allocation5 + $0x8e8] sm:$0xff]
    %v375 = vld [vmem:[#allocation5 + $0x8f0] sm:$0xff]
    %v376 = vld [vmem:[#allocation5 + $0x8f8] sm:$0xff]
    %v377 = vld [vmem:[#allocation7] sm:$0x3f]
    %v379 = vlaneseq
    %v380 = vshrl.u32 %v379, 7
    %v381 = vsub.s32 0, %v380
    %v382 = vrot.slane %v377, %v381
    %v383 = vlaneseq
    %v384 = vshrl.u32 %v383, 7
    %v385 = vsub.s32 1, %v384
    %v386 = vrot.slane %v377, %v385
    %v387 = vlaneseq
    %v388 = vshrl.u32 %v387, 7
    %v389 = vsub.s32 2, %v388
    %v390 = vrot.slane %v377, %v389
    %v391 = vlaneseq
    %v392 = vshrl.u32 %v391, 7
    %v393 = vsub.s32 3, %v392
    %v394 = vrot.slane %v377, %v393
    %v395 = vlaneseq
    %v396 = vshrl.u32 %v395, 7
    %v397 = vsub.s32 4, %v396
    %v398 = vrot.slane %v377, %v397
    %v399 = vlaneseq
    %v400 = vshrl.u32 %v399, 7
    %v401 = vsub.s32 5, %v400
    %v402 = vrot.slane %v377, %v401
    %v697 = vunpack.c.l.b16 %v89
    %v698 = vunpack.c.h.b16 %v89
    %v699 = vunpack.c.l.b16 %v90
    %v700 = vunpack.c.h.b16 %v90
    %v701 = vunpack.c.l.b16 %v91
    %v702 = vunpack.c.h.b16 %v91
    %v703 = vunpack.c.l.b16 %v92
    %v704 = vunpack.c.h.b16 %v92
    %v705 = vunpack.c.l.b16 %v93
    %v706 = vunpack.c.h.b16 %v93
    %v707 = vunpack.c.l.b16 %v94
    %v708 = vunpack.c.h.b16 %v94
    %v709 = vunpack.c.l.b16 %v95
    %v710 = vunpack.c.h.b16 %v95
    %v711 = vunpack.c.l.b16 %v96
    %v712 = vunpack.c.h.b16 %v96
    %v713 = vunpack.c.l.b16 %v97
    %v714 = vunpack.c.h.b16 %v97
    %v715 = vunpack.c.l.b16 %v98
    %v716 = vunpack.c.h.b16 %v98
    %v717 = vunpack.c.l.b16 %v99
    %v718 = vunpack.c.h.b16 %v99
    %v719 = vunpack.c.l.b16 %v100
    %v720 = vunpack.c.h.b16 %v100
    %v721 = vunpack.c.l.b16 %v101
    %v722 = vunpack.c.h.b16 %v101
    %v723 = vunpack.c.l.b16 %v102
    %v724 = vunpack.c.h.b16 %v102
    %v725 = vunpack.c.l.b16 %v103
    %v726 = vunpack.c.h.b16 %v103
    %v727 = vunpack.c.l.b16 %v104
    %v728 = vunpack.c.h.b16 %v104
    %v729 = vunpack.c.l.b16 %v105
    %v730 = vunpack.c.h.b16 %v105
    %v731 = vunpack.c.l.b16 %v106
    %v732 = vunpack.c.h.b16 %v106
    %v733 = vunpack.c.l.b16 %v107
    %v734 = vunpack.c.h.b16 %v107
    %v735 = vunpack.c.l.b16 %v108
    %v736 = vunpack.c.h.b16 %v108
    %v737 = vunpack.c.l.b16 %v109
    %v738 = vunpack.c.h.b16 %v109
    %v739 = vunpack.c.l.b16 %v110
    %v740 = vunpack.c.h.b16 %v110
    %v741 = vunpack.c.l.b16 %v111
    %v742 = vunpack.c.h.b16 %v111
    %v743 = vunpack.c.l.b16 %v112
    %v744 = vunpack.c.h.b16 %v112
    %v745 = vunpack.c.l.b16 %v113
    %v746 = vunpack.c.h.b16 %v113
    %v747 = vunpack.c.l.b16 %v114
    %v748 = vunpack.c.h.b16 %v114
    %v749 = vunpack.c.l.b16 %v115
    %v750 = vunpack.c.h.b16 %v115
    %v751 = vunpack.c.l.b16 %v116
    %v752 = vunpack.c.h.b16 %v116
    %v753 = vunpack.c.l.b16 %v117
    %v754 = vunpack.c.h.b16 %v117
    %v755 = vunpack.c.l.b16 %v118
    %v756 = vunpack.c.h.b16 %v118
    %v757 = vunpack.c.l.b16 %v119
    %v758 = vunpack.c.h.b16 %v119
    %v759 = vunpack.c.l.b16 %v120
    %v760 = vunpack.c.h.b16 %v120
    %v761 = vunpack.c.l.b16 %v121
    %v762 = vunpack.c.h.b16 %v121
    %v763 = vunpack.c.l.b16 %v122
    %v764 = vunpack.c.h.b16 %v122
    %v765 = vunpack.c.l.b16 %v123
    %v766 = vunpack.c.h.b16 %v123
    %v767 = vunpack.c.l.b16 %v124
    %v768 = vunpack.c.h.b16 %v124
    %v769 = vunpack.c.l.b16 %v125
    %v770 = vunpack.c.h.b16 %v125
    %v771 = vunpack.c.l.b16 %v126
    %v772 = vunpack.c.h.b16 %v126
    %v773 = vunpack.c.l.b16 %v127
    %v774 = vunpack.c.h.b16 %v127
    %v775 = vunpack.c.l.b16 %v128
    %v776 = vunpack.c.h.b16 %v128
    %v777 = vunpack.c.l.b16 %v129
    %v778 = vunpack.c.h.b16 %v129
    %v779 = vunpack.c.l.b16 %v130
    %v780 = vunpack.c.h.b16 %v130
    %v781 = vunpack.c.l.b16 %v131
    %v782 = vunpack.c.h.b16 %v131
    %v783 = vunpack.c.l.b16 %v132
    %v784 = vunpack.c.h.b16 %v132
    %v785 = vunpack.c.l.b16 %v133
    %v786 = vunpack.c.h.b16 %v133
    %v787 = vunpack.c.l.b16 %v134
    %v788 = vunpack.c.h.b16 %v134
    %v789 = vunpack.c.l.b16 %v135
    %v790 = vunpack.c.h.b16 %v135
    %v791 = vunpack.c.l.b16 %v136
    %v792 = vunpack.c.h.b16 %v136
    %v793 = vunpack.c.l.b16 %v137
    %v794 = vunpack.c.h.b16 %v137
    %v795 = vunpack.c.l.b16 %v138
    %v796 = vunpack.c.h.b16 %v138
    %v797 = vunpack.c.l.b16 %v139
    %v798 = vunpack.c.h.b16 %v139
    %v799 = vunpack.c.l.b16 %v140
    %v800 = vunpack.c.h.b16 %v140
    %v801 = vunpack.c.l.b16 %v141
    %v802 = vunpack.c.h.b16 %v141
    %v803 = vunpack.c.l.b16 %v142
    %v804 = vunpack.c.h.b16 %v142
    %v805 = vunpack.c.l.b16 %v143
    %v806 = vunpack.c.h.b16 %v143
    %v807 = vunpack.c.l.b16 %v144
    %v808 = vunpack.c.h.b16 %v144
    %v809 = vunpack.c.l.b16 %v145
    %v810 = vunpack.c.h.b16 %v145
    %v811 = vunpack.c.l.b16 %v146
    %v812 = vunpack.c.h.b16 %v146
    %v813 = vunpack.c.l.b16 %v147
    %v814 = vunpack.c.h.b16 %v147
    %v815 = vunpack.c.l.b16 %v148
    %v816 = vunpack.c.h.b16 %v148
    %v817 = vunpack.c.l.b16 %v149
    %v818 = vunpack.c.h.b16 %v149
    %v819 = vunpack.c.l.b16 %v150
    %v820 = vunpack.c.h.b16 %v150
    %v821 = vunpack.c.l.b16 %v151
    %v822 = vunpack.c.h.b16 %v151
    %v823 = vunpack.c.l.b16 %v152
    %v824 = vunpack.c.h.b16 %v152
    %v825 = vunpack.c.l.b16 %v153
    %v826 = vunpack.c.h.b16 %v153
    %v827 = vunpack.c.l.b16 %v154
    %v828 = vunpack.c.h.b16 %v154
    %v829 = vunpack.c.l.b16 %v155
    %v830 = vunpack.c.h.b16 %v155
    %v831 = vunpack.c.l.b16 %v156
    %v832 = vunpack.c.h.b16 %v156
    %v833 = vunpack.c.l.b16 %v157
    %v834 = vunpack.c.h.b16 %v157
    %v835 = vunpack.c.l.b16 %v158
    %v836 = vunpack.c.h.b16 %v158
    %v837 = vunpack.c.l.b16 %v159
    %v838 = vunpack.c.h.b16 %v159
    %v839 = vunpack.c.l.b16 %v160
    %v840 = vunpack.c.h.b16 %v160
    %v841 = vunpack.c.l.b16 %v161
    %v842 = vunpack.c.h.b16 %v161
    %v843 = vunpack.c.l.b16 %v162
    %v844 = vunpack.c.h.b16 %v162
    %v845 = vunpack.c.l.b16 %v163
    %v846 = vunpack.c.h.b16 %v163
    %v847 = vunpack.c.l.b16 %v164
    %v848 = vunpack.c.h.b16 %v164
    %v849 = vunpack.c.l.b16 %v165
    %v850 = vunpack.c.h.b16 %v165
    %v851 = vunpack.c.l.b16 %v166
    %v852 = vunpack.c.h.b16 %v166
    %v853 = vunpack.c.l.b16 %v167
    %v854 = vunpack.c.h.b16 %v167
    %v855 = vunpack.c.l.b16 %v168
    %v856 = vunpack.c.h.b16 %v168
    %v857 = vunpack.c.l.b16 %v169
    %v858 = vunpack.c.h.b16 %v169
    %v859 = vunpack.c.l.b16 %v170
    %v860 = vunpack.c.h.b16 %v170
    %v861 = vunpack.c.l.b16 %v171
    %v862 = vunpack.c.h.b16 %v171
    %v863 = vunpack.c.l.b16 %v172
    %v864 = vunpack.c.h.b16 %v172
    %v865 = vunpack.c.l.b16 %v173
    %v866 = vunpack.c.h.b16 %v173
    %v867 = vunpack.c.l.b16 %v174
    %v868 = vunpack.c.h.b16 %v174
    %v869 = vunpack.c.l.b16 %v175
    %v870 = vunpack.c.h.b16 %v175
    %v871 = vunpack.c.l.b16 %v176
    %v872 = vunpack.c.h.b16 %v176
    %v873 = vunpack.c.l.b16 %v177
    %v874 = vunpack.c.h.b16 %v177
    %v875 = vunpack.c.l.b16 %v178
    %v876 = vunpack.c.h.b16 %v178
    %v877 = vunpack.c.l.b16 %v179
    %v878 = vunpack.c.h.b16 %v179
    %v879 = vunpack.c.l.b16 %v180
    %v880 = vunpack.c.h.b16 %v180
    %v881 = vunpack.c.l.b16 %v181
    %v882 = vunpack.c.h.b16 %v181
    %v883 = vunpack.c.l.b16 %v182
    %v884 = vunpack.c.h.b16 %v182
    %v885 = vunpack.c.l.b16 %v183
    %v886 = vunpack.c.h.b16 %v183
    %v887 = vunpack.c.l.b16 %v184
    %v888 = vunpack.c.h.b16 %v184
    %v889 = vunpack.c.l.b16 %v185
    %v890 = vunpack.c.h.b16 %v185
    %v891 = vunpack.c.l.b16 %v186
    %v892 = vunpack.c.h.b16 %v186
    %v893 = vunpack.c.l.b16 %v187
    %v894 = vunpack.c.h.b16 %v187
    %v895 = vunpack.c.l.b16 %v188
    %v896 = vunpack.c.h.b16 %v188
    %v897 = vunpack.c.l.b16 %v189
    %v898 = vunpack.c.h.b16 %v189
    %v899 = vunpack.c.l.b16 %v190
    %v900 = vunpack.c.h.b16 %v190
    %v901 = vunpack.c.l.b16 %v191
    %v902 = vunpack.c.h.b16 %v191
    %v903 = vunpack.c.l.b16 %v192
    %v904 = vunpack.c.h.b16 %v192
    %v905 = vunpack.c.l.b16 %v193
    %v906 = vunpack.c.h.b16 %v193
    %v907 = vunpack.c.l.b16 %v194
    %v908 = vunpack.c.h.b16 %v194
    %v909 = vunpack.c.l.b16 %v195
    %v910 = vunpack.c.h.b16 %v195
    %v911 = vunpack.c.l.b16 %v196
    %v912 = vunpack.c.h.b16 %v196
    %v913 = vunpack.c.l.b16 %v197
    %v914 = vunpack.c.h.b16 %v197
    %v915 = vunpack.c.l.b16 %v198
    %v916 = vunpack.c.h.b16 %v198
    %v917 = vunpack.c.l.b16 %v199
    %v918 = vunpack.c.h.b16 %v199
    %v919 = vunpack.c.l.b16 %v200
    %v920 = vunpack.c.h.b16 %v200
    %v921 = vunpack.c.l.b16 %v201
    %v922 = vunpack.c.h.b16 %v201
    %v923 = vunpack.c.l.b16 %v202
    %v924 = vunpack.c.h.b16 %v202
    %v925 = vunpack.c.l.b16 %v203
    %v926 = vunpack.c.h.b16 %v203
    %v927 = vunpack.c.l.b16 %v204
    %v928 = vunpack.c.h.b16 %v204
    %v929 = vunpack.c.l.b16 %v205
    %v930 = vunpack.c.h.b16 %v205
    %v931 = vunpack.c.l.b16 %v206
    %v932 = vunpack.c.h.b16 %v206
    %v933 = vunpack.c.l.b16 %v207
    %v934 = vunpack.c.h.b16 %v207
    %v935 = vunpack.c.l.b16 %v208
    %v936 = vunpack.c.h.b16 %v208
    %v937 = vunpack.c.l.b16 %v209
    %v938 = vunpack.c.h.b16 %v209
    %v939 = vunpack.c.l.b16 %v210
    %v940 = vunpack.c.h.b16 %v210
    %v941 = vunpack.c.l.b16 %v211
    %v942 = vunpack.c.h.b16 %v211
    %v943 = vunpack.c.l.b16 %v212
    %v944 = vunpack.c.h.b16 %v212
    %v945 = vunpack.c.l.b16 %v213
    %v946 = vunpack.c.h.b16 %v213
    %v947 = vunpack.c.l.b16 %v214
    %v948 = vunpack.c.h.b16 %v214
    %v949 = vunpack.c.l.b16 %v215
    %v950 = vunpack.c.h.b16 %v215
    %v951 = vunpack.c.l.b16 %v216
    %v952 = vunpack.c.h.b16 %v216
    %v953 = vunpack.c.l.b16 %v217
    %v954 = vunpack.c.h.b16 %v217
    %v955 = vunpack.c.l.b16 %v218
    %v956 = vunpack.c.h.b16 %v218
    %v957 = vunpack.c.l.b16 %v219
    %v958 = vunpack.c.h.b16 %v219
    %v959 = vunpack.c.l.b16 %v220
    %v960 = vunpack.c.h.b16 %v220
    %v961 = vunpack.c.l.b16 %v221
    %v962 = vunpack.c.h.b16 %v221
    %v963 = vunpack.c.l.b16 %v222
    %v964 = vunpack.c.h.b16 %v222
    %v965 = vunpack.c.l.b16 %v223
    %v966 = vunpack.c.h.b16 %v223
    %v967 = vunpack.c.l.b16 %v224
    %v968 = vunpack.c.h.b16 %v224
    %v969 = vunpack.c.l.b16 %v225
    %v970 = vunpack.c.h.b16 %v225
    %v971 = vunpack.c.l.b16 %v226
    %v972 = vunpack.c.h.b16 %v226
    %v973 = vunpack.c.l.b16 %v227
    %v974 = vunpack.c.h.b16 %v227
    %v975 = vunpack.c.l.b16 %v228
    %v976 = vunpack.c.h.b16 %v228
    %v977 = vunpack.c.l.b16 %v229
    %v978 = vunpack.c.h.b16 %v229
    %v979 = vunpack.c.l.b16 %v230
    %v980 = vunpack.c.h.b16 %v230
    %v981 = vunpack.c.l.b16 %v231
    %v982 = vunpack.c.h.b16 %v231
    %v983 = vunpack.c.l.b16 %v232
    %v984 = vunpack.c.h.b16 %v232
    %v985 = vunpack.c.l.b16 %v233
    %v986 = vunpack.c.h.b16 %v233
    %v987 = vunpack.c.l.b16 %v234
    %v988 = vunpack.c.h.b16 %v234
    %v989 = vunpack.c.l.b16 %v235
    %v990 = vunpack.c.h.b16 %v235
    %v991 = vunpack.c.l.b16 %v236
    %v992 = vunpack.c.h.b16 %v236
    %v993 = vunpack.c.l.b16 %v237
    %v994 = vunpack.c.h.b16 %v237
    %v995 = vunpack.c.l.b16 %v238
    %v996 = vunpack.c.h.b16 %v238
    %v997 = vunpack.c.l.b16 %v239
    %v998 = vunpack.c.h.b16 %v239
    %v999 = vunpack.c.l.b16 %v240
    %v1000 = vunpack.c.h.b16 %v240
    %v1001 = vunpack.c.l.b16 %v241
    %v1002 = vunpack.c.h.b16 %v241
    %v1003 = vunpack.c.l.b16 %v242
    %v1004 = vunpack.c.h.b16 %v242
    %v1005 = vunpack.c.l.b16 %v243
    %v1006 = vunpack.c.h.b16 %v243
    %v1007 = vunpack.c.l.b16 %v244
    %v1008 = vunpack.c.h.b16 %v244
    %v1009 = vunpack.c.l.b16 %v245
    %v1010 = vunpack.c.h.b16 %v245
    %v1011 = vunpack.c.l.b16 %v246
    %v1012 = vunpack.c.h.b16 %v246
    %v1013 = vunpack.c.l.b16 %v247
    %v1014 = vunpack.c.h.b16 %v247
    %v1015 = vunpack.c.l.b16 %v248
    %v1016 = vunpack.c.h.b16 %v248
    %v1017 = vunpack.c.l.b16 %v249
    %v1018 = vunpack.c.h.b16 %v249
    %v1019 = vunpack.c.l.b16 %v250
    %v1020 = vunpack.c.h.b16 %v250
    %v1021 = vunpack.c.l.b16 %v251
    %v1022 = vunpack.c.h.b16 %v251
    %v1023 = vunpack.c.l.b16 %v252
    %v1024 = vunpack.c.h.b16 %v252
    %v1025 = vunpack.c.l.b16 %v253
    %v1026 = vunpack.c.h.b16 %v253
    %v1027 = vunpack.c.l.b16 %v254
    %v1028 = vunpack.c.h.b16 %v254
    %v1029 = vunpack.c.l.b16 %v255
    %v1030 = vunpack.c.h.b16 %v255
    %v1031 = vunpack.c.l.b16 %v256
    %v1032 = vunpack.c.h.b16 %v256
    %v1033 = vunpack.c.l.b16 %v257
    %v1034 = vunpack.c.h.b16 %v257
    %v1035 = vunpack.c.l.b16 %v258
    %v1036 = vunpack.c.h.b16 %v258
    %v1037 = vunpack.c.l.b16 %v259
    %v1038 = vunpack.c.h.b16 %v259
    %v1039 = vunpack.c.l.b16 %v260
    %v1040 = vunpack.c.h.b16 %v260
    %v1041 = vunpack.c.l.b16 %v261
    %v1042 = vunpack.c.h.b16 %v261
    %v1043 = vunpack.c.l.b16 %v262
    %v1044 = vunpack.c.h.b16 %v262
    %v1045 = vunpack.c.l.b16 %v263
    %v1046 = vunpack.c.h.b16 %v263
    %v1047 = vunpack.c.l.b16 %v264
    %v1048 = vunpack.c.h.b16 %v264
    %v1049 = vunpack.c.l.b16 %v265
    %v1050 = vunpack.c.h.b16 %v265
    %v1051 = vunpack.c.l.b16 %v266
    %v1052 = vunpack.c.h.b16 %v266
    %v1053 = vunpack.c.l.b16 %v267
    %v1054 = vunpack.c.h.b16 %v267
    %v1055 = vunpack.c.l.b16 %v268
    %v1056 = vunpack.c.h.b16 %v268
    %v1057 = vunpack.c.l.b16 %v269
    %v1058 = vunpack.c.h.b16 %v269
    %v1059 = vunpack.c.l.b16 %v270
    %v1060 = vunpack.c.h.b16 %v270
    %v1061 = vunpack.c.l.b16 %v271
    %v1062 = vunpack.c.h.b16 %v271
    %v1063 = vunpack.c.l.b16 %v272
    %v1064 = vunpack.c.h.b16 %v272
    %v1065 = vunpack.c.l.b16 %v273
    %v1066 = vunpack.c.h.b16 %v273
    %v1067 = vunpack.c.l.b16 %v274
    %v1068 = vunpack.c.h.b16 %v274
    %v1069 = vunpack.c.l.b16 %v275
    %v1070 = vunpack.c.h.b16 %v275
    %v1071 = vunpack.c.l.b16 %v276
    %v1072 = vunpack.c.h.b16 %v276
    %v1073 = vunpack.c.l.b16 %v277
    %v1074 = vunpack.c.h.b16 %v277
    %v1075 = vunpack.c.l.b16 %v278
    %v1076 = vunpack.c.h.b16 %v278
    %v1077 = vunpack.c.l.b16 %v279
    %v1078 = vunpack.c.h.b16 %v279
    %v1079 = vunpack.c.l.b16 %v280
    %v1080 = vunpack.c.h.b16 %v280
    %v1081 = vunpack.c.l.b16 %v281
    %v1082 = vunpack.c.h.b16 %v281
    %v1083 = vunpack.c.l.b16 %v282
    %v1084 = vunpack.c.h.b16 %v282
    %v1085 = vunpack.c.l.b16 %v283
    %v1086 = vunpack.c.h.b16 %v283
    %v1087 = vunpack.c.l.b16 %v284
    %v1088 = vunpack.c.h.b16 %v284
    %v1089 = vunpack.c.l.b16 %v285
    %v1090 = vunpack.c.h.b16 %v285
    %v1091 = vunpack.c.l.b16 %v286
    %v1092 = vunpack.c.h.b16 %v286
    %v1093 = vunpack.c.l.b16 %v287
    %v1094 = vunpack.c.h.b16 %v287
    %v1095 = vunpack.c.l.b16 %v288
    %v1096 = vunpack.c.h.b16 %v288
    %v1097 = vunpack.c.l.b16 %v289
    %v1098 = vunpack.c.h.b16 %v289
    %v1099 = vunpack.c.l.b16 %v290
    %v1100 = vunpack.c.h.b16 %v290
    %v1101 = vunpack.c.l.b16 %v291
    %v1102 = vunpack.c.h.b16 %v291
    %v1103 = vunpack.c.l.b16 %v292
    %v1104 = vunpack.c.h.b16 %v292
    %v1105 = vunpack.c.l.b16 %v293
    %v1106 = vunpack.c.h.b16 %v293
    %v1107 = vunpack.c.l.b16 %v294
    %v1108 = vunpack.c.h.b16 %v294
    %v1109 = vunpack.c.l.b16 %v295
    %v1110 = vunpack.c.h.b16 %v295
    %v1111 = vunpack.c.l.b16 %v296
    %v1112 = vunpack.c.h.b16 %v296
    %v1113 = vunpack.c.l.b16 %v297
    %v1114 = vunpack.c.h.b16 %v297
    %v1115 = vunpack.c.l.b16 %v298
    %v1116 = vunpack.c.h.b16 %v298
    %v1117 = vunpack.c.l.b16 %v299
    %v1118 = vunpack.c.h.b16 %v299
    %v1119 = vunpack.c.l.b16 %v300
    %v1120 = vunpack.c.h.b16 %v300
    %v1121 = vunpack.c.l.b16 %v301
    %v1122 = vunpack.c.h.b16 %v301
    %v1123 = vunpack.c.l.b16 %v302
    %v1124 = vunpack.c.h.b16 %v302
    %v1125 = vunpack.c.l.b16 %v303
    %v1126 = vunpack.c.h.b16 %v303
    %v1127 = vunpack.c.l.b16 %v304
    %v1128 = vunpack.c.h.b16 %v304
    %v1129 = vunpack.c.l.b16 %v305
    %v1130 = vunpack.c.h.b16 %v305
    %v1131 = vunpack.c.l.b16 %v306
    %v1132 = vunpack.c.h.b16 %v306
    %v1133 = vunpack.c.l.b16 %v307
    %v1134 = vunpack.c.h.b16 %v307
    %v1135 = vunpack.c.l.b16 %v308
    %v1136 = vunpack.c.h.b16 %v308
    %v1137 = vunpack.c.l.b16 %v309
    %v1138 = vunpack.c.h.b16 %v309
    %v1139 = vunpack.c.l.b16 %v310
    %v1140 = vunpack.c.h.b16 %v310
    %v1141 = vunpack.c.l.b16 %v311
    %v1142 = vunpack.c.h.b16 %v311
    %v1143 = vunpack.c.l.b16 %v312
    %v1144 = vunpack.c.h.b16 %v312
    %v1145 = vunpack.c.l.b16 %v313
    %v1146 = vunpack.c.h.b16 %v313
    %v1147 = vunpack.c.l.b16 %v314
    %v1148 = vunpack.c.h.b16 %v314
    %v1149 = vunpack.c.l.b16 %v315
    %v1150 = vunpack.c.h.b16 %v315
    %v1151 = vunpack.c.l.b16 %v316
    %v1152 = vunpack.c.h.b16 %v316
    %v1153 = vunpack.c.l.b16 %v317
    %v1154 = vunpack.c.h.b16 %v317
    %v1155 = vunpack.c.l.b16 %v318
    %v1156 = vunpack.c.h.b16 %v318
    %v1157 = vunpack.c.l.b16 %v319
    %v1158 = vunpack.c.h.b16 %v319
    %v1159 = vunpack.c.l.b16 %v320
    %v1160 = vunpack.c.h.b16 %v320
    %v1161 = vunpack.c.l.b16 %v321
    %v1162 = vunpack.c.h.b16 %v321
    %v1163 = vunpack.c.l.b16 %v322
    %v1164 = vunpack.c.h.b16 %v322
    %v1165 = vunpack.c.l.b16 %v323
    %v1166 = vunpack.c.h.b16 %v323
    %v1167 = vunpack.c.l.b16 %v324
    %v1168 = vunpack.c.h.b16 %v324
    %v1169 = vunpack.c.l.b16 %v325
    %v1170 = vunpack.c.h.b16 %v325
    %v1171 = vunpack.c.l.b16 %v326
    %v1172 = vunpack.c.h.b16 %v326
    %v1173 = vunpack.c.l.b16 %v327
    %v1174 = vunpack.c.h.b16 %v327
    %v1175 = vunpack.c.l.b16 %v328
    %v1176 = vunpack.c.h.b16 %v328
    %v1177 = vunpack.c.l.b16 %v329
    %v1178 = vunpack.c.h.b16 %v329
    %v1179 = vunpack.c.l.b16 %v330
    %v1180 = vunpack.c.h.b16 %v330
    %v1181 = vunpack.c.l.b16 %v331
    %v1182 = vunpack.c.h.b16 %v331
    %v1183 = vunpack.c.l.b16 %v332
    %v1184 = vunpack.c.h.b16 %v332
    %v1185 = vunpack.c.l.b16 %v333
    %v1186 = vunpack.c.h.b16 %v333
    %v1187 = vunpack.c.l.b16 %v334
    %v1188 = vunpack.c.h.b16 %v334
    %v1189 = vunpack.c.l.b16 %v335
    %v1190 = vunpack.c.h.b16 %v335
    %v1191 = vunpack.c.l.b16 %v336
    %v1192 = vunpack.c.h.b16 %v336
    %v1193 = vunpack.c.l.b16 %v337
    %v1194 = vunpack.c.h.b16 %v337
    %v1195 = vunpack.c.l.b16 %v338
    %v1196 = vunpack.c.h.b16 %v338
    %v1197 = vunpack.c.l.b16 %v339
    %v1198 = vunpack.c.h.b16 %v339
    %v1199 = vunpack.c.l.b16 %v340
    %v1200 = vunpack.c.h.b16 %v340
    %v1201 = vunpack.c.l.b16 %v341
    %v1202 = vunpack.c.h.b16 %v341
    %v1203 = vunpack.c.l.b16 %v342
    %v1204 = vunpack.c.h.b16 %v342
    %v1205 = vunpack.c.l.b16 %v343
    %v1206 = vunpack.c.h.b16 %v343
    %v1207 = vunpack.c.l.b16 %v344
    %v1208 = vunpack.c.h.b16 %v344
    %v1209 = vunpack.c.l.b16 %v345
    %v1210 = vunpack.c.h.b16 %v345
    %v1211 = vunpack.c.l.b16 %v346
    %v1212 = vunpack.c.h.b16 %v346
    %v1213 = vunpack.c.l.b16 %v347
    %v1214 = vunpack.c.h.b16 %v347
    %v1215 = vunpack.c.l.b16 %v348
    %v1216 = vunpack.c.h.b16 %v348
    %v1217 = vunpack.c.l.b16 %v349
    %v1218 = vunpack.c.h.b16 %v349
    %v1219 = vunpack.c.l.b16 %v350
    %v1220 = vunpack.c.h.b16 %v350
    %v1221 = vunpack.c.l.b16 %v351
    %v1222 = vunpack.c.h.b16 %v351
    %v1223 = vunpack.c.l.b16 %v352
    %v1224 = vunpack.c.h.b16 %v352
    %v1225 = vunpack.c.l.b16 %v353
    %v1226 = vunpack.c.h.b16 %v353
    %v1227 = vunpack.c.l.b16 %v354
    %v1228 = vunpack.c.h.b16 %v354
    %v1229 = vunpack.c.l.b16 %v355
    %v1230 = vunpack.c.h.b16 %v355
    %v1231 = vunpack.c.l.b16 %v356
    %v1232 = vunpack.c.h.b16 %v356
    %v1233 = vunpack.c.l.b16 %v357
    %v1234 = vunpack.c.h.b16 %v357
    %v1235 = vunpack.c.l.b16 %v358
    %v1236 = vunpack.c.h.b16 %v358
    %v1237 = vunpack.c.l.b16 %v359
    %v1238 = vunpack.c.h.b16 %v359
    %v1239 = vunpack.c.l.b16 %v360
    %v1240 = vunpack.c.h.b16 %v360
    %v1241 = vunpack.c.l.b16 %v361
    %v1242 = vunpack.c.h.b16 %v361
    %v1243 = vunpack.c.l.b16 %v362
    %v1244 = vunpack.c.h.b16 %v362
    %v1245 = vunpack.c.l.b16 %v363
    %v1246 = vunpack.c.h.b16 %v363
    %v1247 = vunpack.c.l.b16 %v364
    %v1248 = vunpack.c.h.b16 %v364
    %v1249 = vunpack.c.l.b16 %v365
    %v1250 = vunpack.c.h.b16 %v365
    %v1251 = vunpack.c.l.b16 %v366
    %v1252 = vunpack.c.h.b16 %v366
    %v1253 = vunpack.c.l.b16 %v367
    %v1254 = vunpack.c.h.b16 %v367
    %v1255 = vunpack.c.l.b16 %v368
    %v1256 = vunpack.c.h.b16 %v368
    %v1257 = vunpack.c.l.b16 %v369
    %v1258 = vunpack.c.h.b16 %v369
    %v1259 = vunpack.c.l.b16 %v370
    %v1260 = vunpack.c.h.b16 %v370
    %v1261 = vunpack.c.l.b16 %v371
    %v1262 = vunpack.c.h.b16 %v371
    %v1263 = vunpack.c.l.b16 %v372
    %v1264 = vunpack.c.h.b16 %v372
    %v1265 = vunpack.c.l.b16 %v373
    %v1266 = vunpack.c.h.b16 %v373
    %v1267 = vunpack.c.l.b16 %v374
    %v1268 = vunpack.c.h.b16 %v374
    %v1269 = vunpack.c.l.b16 %v375
    %v1270 = vunpack.c.h.b16 %v375
    %v1271 = vunpack.c.l.b16 %v376
    %v1272 = vunpack.c.h.b16 %v376
    %v1273 = vpack.c.b16 %v703, %v697
    %v1274 = vpack.c.b16 %v704, %v698
    %v1275 = vpack.c.b16 %v705, %v699
    %v1276 = vpack.c.b16 %v706, %v700
    %v1277 = vpack.c.b16 %v707, %v701
    %v1278 = vpack.c.b16 %v708, %v702
    %v1279 = vpack.c.b16 %v715, %v709
    %v1280 = vpack.c.b16 %v716, %v710
    %v1281 = vpack.c.b16 %v717, %v711
    %v1282 = vpack.c.b16 %v718, %v712
    %v1283 = vpack.c.b16 %v719, %v713
    %v1284 = vpack.c.b16 %v720, %v714
    %v1285 = vpack.c.b16 %v727, %v721
    %v1286 = vpack.c.b16 %v728, %v722
    %v1287 = vpack.c.b16 %v729, %v723
    %v1288 = vpack.c.b16 %v730, %v724
    %v1289 = vpack.c.b16 %v731, %v725
    %v1290 = vpack.c.b16 %v732, %v726
    %v1291 = vpack.c.b16 %v739, %v733
    %v1292 = vpack.c.b16 %v740, %v734
    %v1293 = vpack.c.b16 %v741, %v735
    %v1294 = vpack.c.b16 %v742, %v736
    %v1295 = vpack.c.b16 %v743, %v737
    %v1296 = vpack.c.b16 %v744, %v738
    %v1297 = vpack.c.b16 %v751, %v745
    %v1298 = vpack.c.b16 %v752, %v746
    %v1299 = vpack.c.b16 %v753, %v747
    %v1300 = vpack.c.b16 %v754, %v748
    %v1301 = vpack.c.b16 %v755, %v749
    %v1302 = vpack.c.b16 %v756, %v750
    %v1303 = vpack.c.b16 %v763, %v757
    %v1304 = vpack.c.b16 %v764, %v758
    %v1305 = vpack.c.b16 %v765, %v759
    %v1306 = vpack.c.b16 %v766, %v760
    %v1307 = vpack.c.b16 %v767, %v761
    %v1308 = vpack.c.b16 %v768, %v762
    %v1309 = vpack.c.b16 %v775, %v769
    %v1310 = vpack.c.b16 %v776, %v770
    %v1311 = vpack.c.b16 %v777, %v771
    %v1312 = vpack.c.b16 %v778, %v772
    %v1313 = vpack.c.b16 %v779, %v773
    %v1314 = vpack.c.b16 %v780, %v774
    %v1315 = vpack.c.b16 %v787, %v781
    %v1316 = vpack.c.b16 %v788, %v782
    %v1317 = vpack.c.b16 %v789, %v783
    %v1318 = vpack.c.b16 %v790, %v784
    %v1319 = vpack.c.b16 %v791, %v785
    %v1320 = vpack.c.b16 %v792, %v786
    %v1321 = vpack.c.b16 %v799, %v793
    %v1322 = vpack.c.b16 %v800, %v794
    %v1323 = vpack.c.b16 %v801, %v795
    %v1324 = vpack.c.b16 %v802, %v796
    %v1325 = vpack.c.b16 %v803, %v797
    %v1326 = vpack.c.b16 %v804, %v798
    %v1327 = vpack.c.b16 %v811, %v805
    %v1328 = vpack.c.b16 %v812, %v806
    %v1329 = vpack.c.b16 %v813, %v807
    %v1330 = vpack.c.b16 %v814, %v808
    %v1331 = vpack.c.b16 %v815, %v809
    %v1332 = vpack.c.b16 %v816, %v810
    %v1333 = vpack.c.b16 %v823, %v817
    %v1334 = vpack.c.b16 %v824, %v818
    %v1335 = vpack.c.b16 %v825, %v819
    %v1336 = vpack.c.b16 %v826, %v820
    %v1337 = vpack.c.b16 %v827, %v821
    %v1338 = vpack.c.b16 %v828, %v822
    %v1339 = vpack.c.b16 %v835, %v829
    %v1340 = vpack.c.b16 %v836, %v830
    %v1341 = vpack.c.b16 %v837, %v831
    %v1342 = vpack.c.b16 %v838, %v832
    %v1343 = vpack.c.b16 %v839, %v833
    %v1344 = vpack.c.b16 %v840, %v834
    %v1345 = vpack.c.b16 %v847, %v841
    %v1346 = vpack.c.b16 %v848, %v842
    %v1347 = vpack.c.b16 %v849, %v843
    %v1348 = vpack.c.b16 %v850, %v844
    %v1349 = vpack.c.b16 %v851, %v845
    %v1350 = vpack.c.b16 %v852, %v846
    %v1351 = vpack.c.b16 %v859, %v853
    %v1352 = vpack.c.b16 %v860, %v854
    %v1353 = vpack.c.b16 %v861, %v855
    %v1354 = vpack.c.b16 %v862, %v856
    %v1355 = vpack.c.b16 %v863, %v857
    %v1356 = vpack.c.b16 %v864, %v858
    %v1357 = vpack.c.b16 %v871, %v865
    %v1358 = vpack.c.b16 %v872, %v866
    %v1359 = vpack.c.b16 %v873, %v867
    %v1360 = vpack.c.b16 %v874, %v868
    %v1361 = vpack.c.b16 %v875, %v869
    %v1362 = vpack.c.b16 %v876, %v870
    %v1363 = vpack.c.b16 %v883, %v877
    %v1364 = vpack.c.b16 %v884, %v878
    %v1365 = vpack.c.b16 %v885, %v879
    %v1366 = vpack.c.b16 %v886, %v880
    %v1367 = vpack.c.b16 %v887, %v881
    %v1368 = vpack.c.b16 %v888, %v882
    %v1369 = vpack.c.b16 %v895, %v889
    %v1370 = vpack.c.b16 %v896, %v890
    %v1371 = vpack.c.b16 %v897, %v891
    %v1372 = vpack.c.b16 %v898, %v892
    %v1373 = vpack.c.b16 %v899, %v893
    %v1374 = vpack.c.b16 %v900, %v894
    %v1375 = vpack.c.b16 %v907, %v901
    %v1376 = vpack.c.b16 %v908, %v902
    %v1377 = vpack.c.b16 %v909, %v903
    %v1378 = vpack.c.b16 %v910, %v904
    %v1379 = vpack.c.b16 %v911, %v905
    %v1380 = vpack.c.b16 %v912, %v906
    %v1381 = vpack.c.b16 %v919, %v913
    %v1382 = vpack.c.b16 %v920, %v914
    %v1383 = vpack.c.b16 %v921, %v915
    %v1384 = vpack.c.b16 %v922, %v916
    %v1385 = vpack.c.b16 %v923, %v917
    %v1386 = vpack.c.b16 %v924, %v918
    %v1387 = vpack.c.b16 %v931, %v925
    %v1388 = vpack.c.b16 %v932, %v926
    %v1389 = vpack.c.b16 %v933, %v927
    %v1390 = vpack.c.b16 %v934, %v928
    %v1391 = vpack.c.b16 %v935, %v929
    %v1392 = vpack.c.b16 %v936, %v930
    %v1393 = vpack.c.b16 %v943, %v937
    %v1394 = vpack.c.b16 %v944, %v938
    %v1395 = vpack.c.b16 %v945, %v939
    %v1396 = vpack.c.b16 %v946, %v940
    %v1397 = vpack.c.b16 %v947, %v941
    %v1398 = vpack.c.b16 %v948, %v942
    %v1399 = vpack.c.b16 %v955, %v949
    %v1400 = vpack.c.b16 %v956, %v950
    %v1401 = vpack.c.b16 %v957, %v951
    %v1402 = vpack.c.b16 %v958, %v952
    %v1403 = vpack.c.b16 %v959, %v953
    %v1404 = vpack.c.b16 %v960, %v954
    %v1405 = vpack.c.b16 %v967, %v961
    %v1406 = vpack.c.b16 %v968, %v962
    %v1407 = vpack.c.b16 %v969, %v963
    %v1408 = vpack.c.b16 %v970, %v964
    %v1409 = vpack.c.b16 %v971, %v965
    %v1410 = vpack.c.b16 %v972, %v966
    %v1411 = vpack.c.b16 %v979, %v973
    %v1412 = vpack.c.b16 %v980, %v974
    %v1413 = vpack.c.b16 %v981, %v975
    %v1414 = vpack.c.b16 %v982, %v976
    %v1415 = vpack.c.b16 %v983, %v977
    %v1416 = vpack.c.b16 %v984, %v978
    %v1417 = vpack.c.b16 %v991, %v985
    %v1418 = vpack.c.b16 %v992, %v986
    %v1419 = vpack.c.b16 %v993, %v987
    %v1420 = vpack.c.b16 %v994, %v988
    %v1421 = vpack.c.b16 %v995, %v989
    %v1422 = vpack.c.b16 %v996, %v990
    %v1423 = vpack.c.b16 %v1003, %v997
    %v1424 = vpack.c.b16 %v1004, %v998
    %v1425 = vpack.c.b16 %v1005, %v999
    %v1426 = vpack.c.b16 %v1006, %v1000
    %v1427 = vpack.c.b16 %v1007, %v1001
    %v1428 = vpack.c.b16 %v1008, %v1002
    %v1429 = vpack.c.b16 %v1015, %v1009
    %v1430 = vpack.c.b16 %v1016, %v1010
    %v1431 = vpack.c.b16 %v1017, %v1011
    %v1432 = vpack.c.b16 %v1018, %v1012
    %v1433 = vpack.c.b16 %v1019, %v1013
    %v1434 = vpack.c.b16 %v1020, %v1014
    %v1435 = vpack.c.b16 %v1027, %v1021
    %v1436 = vpack.c.b16 %v1028, %v1022
    %v1437 = vpack.c.b16 %v1029, %v1023
    %v1438 = vpack.c.b16 %v1030, %v1024
    %v1439 = vpack.c.b16 %v1031, %v1025
    %v1440 = vpack.c.b16 %v1032, %v1026
    %v1441 = vpack.c.b16 %v1039, %v1033
    %v1442 = vpack.c.b16 %v1040, %v1034
    %v1443 = vpack.c.b16 %v1041, %v1035
    %v1444 = vpack.c.b16 %v1042, %v1036
    %v1445 = vpack.c.b16 %v1043, %v1037
    %v1446 = vpack.c.b16 %v1044, %v1038
    %v1447 = vpack.c.b16 %v1051, %v1045
    %v1448 = vpack.c.b16 %v1052, %v1046
    %v1449 = vpack.c.b16 %v1053, %v1047
    %v1450 = vpack.c.b16 %v1054, %v1048
    %v1451 = vpack.c.b16 %v1055, %v1049
    %v1452 = vpack.c.b16 %v1056, %v1050
    %v1453 = vpack.c.b16 %v1063, %v1057
    %v1454 = vpack.c.b16 %v1064, %v1058
    %v1455 = vpack.c.b16 %v1065, %v1059
    %v1456 = vpack.c.b16 %v1066, %v1060
    %v1457 = vpack.c.b16 %v1067, %v1061
    %v1458 = vpack.c.b16 %v1068, %v1062
    %v1459 = vpack.c.b16 %v1075, %v1069
    %v1460 = vpack.c.b16 %v1076, %v1070
    %v1461 = vpack.c.b16 %v1077, %v1071
    %v1462 = vpack.c.b16 %v1078, %v1072
    %v1463 = vpack.c.b16 %v1079, %v1073
    %v1464 = vpack.c.b16 %v1080, %v1074
    %v1465 = vpack.c.b16 %v1087, %v1081
    %v1466 = vpack.c.b16 %v1088, %v1082
    %v1467 = vpack.c.b16 %v1089, %v1083
    %v1468 = vpack.c.b16 %v1090, %v1084
    %v1469 = vpack.c.b16 %v1091, %v1085
    %v1470 = vpack.c.b16 %v1092, %v1086
    %v1471 = vpack.c.b16 %v1099, %v1093
    %v1472 = vpack.c.b16 %v1100, %v1094
    %v1473 = vpack.c.b16 %v1101, %v1095
    %v1474 = vpack.c.b16 %v1102, %v1096
    %v1475 = vpack.c.b16 %v1103, %v1097
    %v1476 = vpack.c.b16 %v1104, %v1098
    %v1477 = vpack.c.b16 %v1111, %v1105
    %v1478 = vpack.c.b16 %v1112, %v1106
    %v1479 = vpack.c.b16 %v1113, %v1107
    %v1480 = vpack.c.b16 %v1114, %v1108
    %v1481 = vpack.c.b16 %v1115, %v1109
    %v1482 = vpack.c.b16 %v1116, %v1110
    %v1483 = vpack.c.b16 %v1123, %v1117
    %v1484 = vpack.c.b16 %v1124, %v1118
    %v1485 = vpack.c.b16 %v1125, %v1119
    %v1486 = vpack.c.b16 %v1126, %v1120
    %v1487 = vpack.c.b16 %v1127, %v1121
    %v1488 = vpack.c.b16 %v1128, %v1122
    %v1489 = vpack.c.b16 %v1135, %v1129
    %v1490 = vpack.c.b16 %v1136, %v1130
    %v1491 = vpack.c.b16 %v1137, %v1131
    %v1492 = vpack.c.b16 %v1138, %v1132
    %v1493 = vpack.c.b16 %v1139, %v1133
    %v1494 = vpack.c.b16 %v1140, %v1134
    %v1495 = vpack.c.b16 %v1147, %v1141
    %v1496 = vpack.c.b16 %v1148, %v1142
    %v1497 = vpack.c.b16 %v1149, %v1143
    %v1498 = vpack.c.b16 %v1150, %v1144
    %v1499 = vpack.c.b16 %v1151, %v1145
    %v1500 = vpack.c.b16 %v1152, %v1146
    %v1501 = vpack.c.b16 %v1159, %v1153
    %v1502 = vpack.c.b16 %v1160, %v1154
    %v1503 = vpack.c.b16 %v1161, %v1155
    %v1504 = vpack.c.b16 %v1162, %v1156
    %v1505 = vpack.c.b16 %v1163, %v1157
    %v1506 = vpack.c.b16 %v1164, %v1158
    %v1507 = vpack.c.b16 %v1171, %v1165
    %v1508 = vpack.c.b16 %v1172, %v1166
    %v1509 = vpack.c.b16 %v1173, %v1167
    %v1510 = vpack.c.b16 %v1174, %v1168
    %v1511 = vpack.c.b16 %v1175, %v1169
    %v1512 = vpack.c.b16 %v1176, %v1170
    %v1513 = vpack.c.b16 %v1183, %v1177
    %v1514 = vpack.c.b16 %v1184, %v1178
    %v1515 = vpack.c.b16 %v1185, %v1179
    %v1516 = vpack.c.b16 %v1186, %v1180
    %v1517 = vpack.c.b16 %v1187, %v1181
    %v1518 = vpack.c.b16 %v1188, %v1182
    %v1519 = vpack.c.b16 %v1195, %v1189
    %v1520 = vpack.c.b16 %v1196, %v1190
    %v1521 = vpack.c.b16 %v1197, %v1191
    %v1522 = vpack.c.b16 %v1198, %v1192
    %v1523 = vpack.c.b16 %v1199, %v1193
    %v1524 = vpack.c.b16 %v1200, %v1194
    %v1525 = vpack.c.b16 %v1207, %v1201
    %v1526 = vpack.c.b16 %v1208, %v1202
    %v1527 = vpack.c.b16 %v1209, %v1203
    %v1528 = vpack.c.b16 %v1210, %v1204
    %v1529 = vpack.c.b16 %v1211, %v1205
    %v1530 = vpack.c.b16 %v1212, %v1206
    %v1531 = vpack.c.b16 %v1219, %v1213
    %v1532 = vpack.c.b16 %v1220, %v1214
    %v1533 = vpack.c.b16 %v1221, %v1215
    %v1534 = vpack.c.b16 %v1222, %v1216
    %v1535 = vpack.c.b16 %v1223, %v1217
    %v1536 = vpack.c.b16 %v1224, %v1218
    %v1537 = vpack.c.b16 %v1231, %v1225
    %v1538 = vpack.c.b16 %v1232, %v1226
    %v1539 = vpack.c.b16 %v1233, %v1227
    %v1540 = vpack.c.b16 %v1234, %v1228
    %v1541 = vpack.c.b16 %v1235, %v1229
    %v1542 = vpack.c.b16 %v1236, %v1230
    %v1543 = vpack.c.b16 %v1243, %v1237
    %v1544 = vpack.c.b16 %v1244, %v1238
    %v1545 = vpack.c.b16 %v1245, %v1239
    %v1546 = vpack.c.b16 %v1246, %v1240
    %v1547 = vpack.c.b16 %v1247, %v1241
    %v1548 = vpack.c.b16 %v1248, %v1242
    %v1549 = vpack.c.b16 %v1255, %v1249
    %v1550 = vpack.c.b16 %v1256, %v1250
    %v1551 = vpack.c.b16 %v1257, %v1251
    %v1552 = vpack.c.b16 %v1258, %v1252
    %v1553 = vpack.c.b16 %v1259, %v1253
    %v1554 = vpack.c.b16 %v1260, %v1254
    %v1555 = vpack.c.b16 %v1267, %v1261
    %v1556 = vpack.c.b16 %v1268, %v1262
    %v1557 = vpack.c.b16 %v1269, %v1263
    %v1558 = vpack.c.b16 %v1270, %v1264
    %v1559 = vpack.c.b16 %v1271, %v1265
    %v1560 = vpack.c.b16 %v1272, %v1266
    %1849 = vmatprep.subr.bf16.mxu0 %v1274
    %1850 = vmatpush1.bf16.msra.mxu0 %v1273
    %1851 = vmatprep.subr.bf16.mxu0 %v1280
    %1852 = vmatpush1.bf16.msra.mxu0 %v1279
    %1853 = vmatprep.subr.bf16.mxu0 %v1286
    %1854 = vmatpush1.bf16.msra.mxu0 %v1285
    %1855 = vmatprep.subr.bf16.mxu0 %v1292
    %1856 = vmatpush1.bf16.msra.mxu0 %v1291
    %1857 = vmatprep.subr.bf16.mxu0 %v1298
    %1858 = vmatpush1.bf16.msra.mxu0 %v1297
    %1859 = vmatprep.subr.bf16.mxu0 %v1304
    %1860 = vmatpush1.bf16.msra.mxu0 %v1303
    %1861 = vmatprep.subr.bf16.mxu0 %v1310
    %1862 = vmatpush1.bf16.msra.mxu0 %v1309
    %1863 = vmatprep.subr.bf16.mxu0 %v1316
    %1864 = vmatpush1.bf16.msra.mxu0 %v1315
    %1865 = vmatprep.subr.bf16.mxu0 %v1322
    %1866 = vmatpush1.bf16.msra.mxu0 %v1321
    %1867 = vmatprep.subr.bf16.mxu0 %v1328
    %1868 = vmatpush1.bf16.msra.mxu0 %v1327
    %1869 = vmatprep.subr.bf16.mxu0 %v1334
    %1870 = vmatpush1.bf16.msra.mxu0 %v1333
    %1871 = vmatprep.subr.bf16.mxu0 %v1340
    %1872 = vmatpush1.bf16.msra.mxu0 %v1339
    %1873 = vmatprep.subr.bf16.mxu0 %v1346
    %1874 = vmatpush1.bf16.msra.mxu0 %v1345
    %1875 = vmatprep.subr.bf16.mxu0 %v1352
    %1876 = vmatpush1.bf16.msra.mxu0 %v1351
    %1877 = vmatprep.subr.bf16.mxu0 %v1358
    %1878 = vmatpush1.bf16.msra.mxu0 %v1357
    %1879 = vmatprep.subr.bf16.mxu0 %v1364
    %1880 = vmatpush1.bf16.msra.mxu0 %v1363
    %1881 = vmatprep.mubr.bf16.mxu0 %v84
    %1882 = vmatmul.mubr.bf16.gmra.mrb[0].mxu0 %v83
    %v1883 = vpop.f32.mrb[0].mxu0
    %v1884 = vadd.f32 %v382, %v1883
    %v1885 = vpop.f32.mrb[0].mxu0
    %v1886 = vadd.f32 %v386, %v1885
    %v1887 = vpop.f32.mrb[0].mxu0
    %v1888 = vadd.f32 %v382, %v1887
    %v1889 = vpop.f32.mrb[0].mxu0
    %v1890 = vadd.f32 %v386, %v1889
    %1891 = vdwg.mxu0
    %1892 = vmatprep.subr.bf16.mxu0 %v1370
    %1893 = vmatpush1.bf16.msra.mxu0 %v1369
    %1894 = vmatprep.subr.bf16.mxu0 %v1376
    %1895 = vmatpush1.bf16.msra.mxu0 %v1375
    %1896 = vmatprep.subr.bf16.mxu0 %v1382
    %1897 = vmatpush1.bf16.msra.mxu0 %v1381
    %1898 = vmatprep.subr.bf16.mxu0 %v1388
    %1899 = vmatpush1.bf16.msra.mxu0 %v1387
    %1900 = vmatprep.subr.bf16.mxu0 %v1394
    %1901 = vmatpush1.bf16.msra.mxu0 %v1393
    %1902 = vmatprep.subr.bf16.mxu0 %v1400
    %1903 = vmatpush1.bf16.msra.mxu0 %v1399
    %1904 = vmatprep.subr.bf16.mxu0 %v1406
    %1905 = vmatpush1.bf16.msra.mxu0 %v1405
    %1906 = vmatprep.subr.bf16.mxu0 %v1412
    %1907 = vmatpush1.bf16.msra.mxu0 %v1411
    %1908 = vmatprep.subr.bf16.mxu0 %v1418
    %1909 = vmatpush1.bf16.msra.mxu0 %v1417
    %1910 = vmatprep.subr.bf16.mxu0 %v1424
    %1911 = vmatpush1.bf16.msra.mxu0 %v1423
    %1912 = vmatprep.subr.bf16.mxu0 %v1430
    %1913 = vmatpush1.bf16.msra.mxu0 %v1429
    %1914 = vmatprep.subr.bf16.mxu0 %v1436
    %1915 = vmatpush1.bf16.msra.mxu0 %v1435
    %1916 = vmatprep.subr.bf16.mxu0 %v1442
    %1917 = vmatpush1.bf16.msra.mxu0 %v1441
    %1918 = vmatprep.subr.bf16.mxu0 %v1448
    %1919 = vmatpush1.bf16.msra.mxu0 %v1447
    %1920 = vmatprep.subr.bf16.mxu0 %v1454
    %1921 = vmatpush1.bf16.msra.mxu0 %v1453
    %1922 = vmatprep.subr.bf16.mxu0 %v1460
    %1923 = vmatpush1.bf16.msra.mxu0 %v1459
    %1924 = vmatprep.mubr.bf16.mxu0 %v86
    %1925 = vmatmul.mubr.bf16.gmra.mrb[0].mxu0 %v85
    %v1926 = vpop.f32.mrb[0].mxu0
    %v1927 = vadd.f32 %v1884, %v1926
    %v1928 = vpop.f32.mrb[0].mxu0
    %v1929 = vadd.f32 %v1886, %v1928
    %v1930 = vpop.f32.mrb[0].mxu0
    %v1931 = vadd.f32 %v1888, %v1930
    %v1932 = vpop.f32.mrb[0].mxu0
    %v1933 = vadd.f32 %v1890, %v1932
    %1934 = vdwg.mxu0
    %1935 = vmatprep.subr.bf16.mxu0 %v1466
    %1936 = vmatpush1.bf16.msra.mxu0 %v1465
    %1937 = vmatprep.subr.bf16.mxu0 %v1472
    %1938 = vmatpush1.bf16.msra.mxu0 %v1471
    %1939 = vmatprep.subr.bf16.mxu0 %v1478
    %1940 = vmatpush1.bf16.msra.mxu0 %v1477
    %1941 = vmatprep.subr.bf16.mxu0 %v1484
    %1942 = vmatpush1.bf16.msra.mxu0 %v1483
    %1943 = vmatprep.subr.bf16.mxu0 %v1490
    %1944 = vmatpush1.bf16.msra.mxu0 %v1489
    %1945 = vmatprep.subr.bf16.mxu0 %v1496
    %1946 = vmatpush1.bf16.msra.mxu0 %v1495
    %1947 = vmatprep.subr.bf16.mxu0 %v1502
    %1948 = vmatpush1.bf16.msra.mxu0 %v1501
    %1949 = vmatprep.subr.bf16.mxu0 %v1508
    %1950 = vmatpush1.bf16.msra.mxu0 %v1507
    %1951 = vmatprep.subr.bf16.mxu0 %v1514
    %1952 = vmatpush1.bf16.msra.mxu0 %v1513
    %1953 = vmatprep.subr.bf16.mxu0 %v1520
    %1954 = vmatpush1.bf16.msra.mxu0 %v1519
    %1955 = vmatprep.subr.bf16.mxu0 %v1526
    %1956 = vmatpush1.bf16.msra.mxu0 %v1525
    %1957 = vmatprep.subr.bf16.mxu0 %v1532
    %1958 = vmatpush1.bf16.msra.mxu0 %v1531
    %1959 = vmatprep.subr.bf16.mxu0 %v1538
    %1960 = vmatpush1.bf16.msra.mxu0 %v1537
    %1961 = vmatprep.subr.bf16.mxu0 %v1544
    %1962 = vmatpush1.bf16.msra.mxu0 %v1543
    %1963 = vmatprep.subr.bf16.mxu0 %v1550
    %1964 = vmatpush1.bf16.msra.mxu0 %v1549
    %1965 = vmatprep.subr.bf16.mxu0 %v1556
    %1966 = vmatpush1.bf16.msra.mxu0 %v1555
    %1967 = vmatprep.mubr.bf16.mxu0 %v88
    %1968 = vmatmul.mubr.bf16.gmra.mrb[0].mxu0 %v87
    %v1969 = vpop.f32.mrb[0].mxu0
    %v1970 = vadd.f32 %v1927, %v1969
    %v1971 = vpop.f32.mrb[0].mxu0
    %v1972 = vadd.f32 %v1929, %v1971
    %v1973 = vpop.f32.mrb[0].mxu0
    %v1974 = vadd.f32 %v1931, %v1973
    %v1975 = vpop.f32.mrb[0].mxu0
    %v1976 = vadd.f32 %v1933, %v1975
    %1977 = vdwg.mxu0
    %1978 = vmatprep.subr.bf16.mxu0 %v1276
    %1979 = vmatpush1.bf16.msra.mxu0 %v1275
    %1980 = vmatprep.subr.bf16.mxu0 %v1282
    %1981 = vmatpush1.bf16.msra.mxu0 %v1281
    %1982 = vmatprep.subr.bf16.mxu0 %v1288
    %1983 = vmatpush1.bf16.msra.mxu0 %v1287
    %1984 = vmatprep.subr.bf16.mxu0 %v1294
    %1985 = vmatpush1.bf16.msra.mxu0 %v1293
    %1986 = vmatprep.subr.bf16.mxu0 %v1300
    %1987 = vmatpush1.bf16.msra.mxu0 %v1299
    %1988 = vmatprep.subr.bf16.mxu0 %v1306
    %1989 = vmatpush1.bf16.msra.mxu0 %v1305
    %1990 = vmatprep.subr.bf16.mxu0 %v1312
    %1991 = vmatpush1.bf16.msra.mxu0 %v1311
    %1992 = vmatprep.subr.bf16.mxu0 %v1318
    %1993 = vmatpush1.bf16.msra.mxu0 %v1317
    %1994 = vmatprep.subr.bf16.mxu0 %v1324
    %1995 = vmatpush1.bf16.msra.mxu0 %v1323
    %1996 = vmatprep.subr.bf16.mxu0 %v1330
    %1997 = vmatpush1.bf16.msra.mxu0 %v1329
    %1998 = vmatprep.subr.bf16.mxu0 %v1336
    %1999 = vmatpush1.bf16.msra.mxu0 %v1335
    %2000 = vmatprep.subr.bf16.mxu0 %v1342
    %2001 = vmatpush1.bf16.msra.mxu0 %v1341
    %2002 = vmatprep.subr.bf16.mxu0 %v1348
    %2003 = vmatpush1.bf16.msra.mxu0 %v1347
    %2004 = vmatprep.subr.bf16.mxu0 %v1354
    %2005 = vmatpush1.bf16.msra.mxu0 %v1353
    %2006 = vmatprep.subr.bf16.mxu0 %v1360
    %2007 = vmatpush1.bf16.msra.mxu0 %v1359
    %2008 = vmatprep.subr.bf16.mxu0 %v1366
    %2009 = vmatpush1.bf16.msra.mxu0 %v1365
    %2010 = vmatprep.mubr.bf16.mxu0 %v84
    %2011 = vmatmul.mubr.bf16.gmra.mrb[0].mxu0 %v83
    %v2012 = vpop.f32.mrb[0].mxu0
    %v2013 = vadd.f32 %v390, %v2012
    %v2014 = vpop.f32.mrb[0].mxu0
    %v2015 = vadd.f32 %v394, %v2014
    %v2016 = vpop.f32.mrb[0].mxu0
    %v2017 = vadd.f32 %v390, %v2016
    %v2018 = vpop.f32.mrb[0].mxu0
    %v2019 = vadd.f32 %v394, %v2018
    %2020 = vdwg.mxu0
    %2021 = vmatprep.subr.bf16.mxu0 %v1372
    %2022 = vmatpush1.bf16.msra.mxu0 %v1371
    %2023 = vmatprep.subr.bf16.mxu0 %v1378
    %2024 = vmatpush1.bf16.msra.mxu0 %v1377
    %2025 = vmatprep.subr.bf16.mxu0 %v1384
    %2026 = vmatpush1.bf16.msra.mxu0 %v1383
    %2027 = vmatprep.subr.bf16.mxu0 %v1390
    %2028 = vmatpush1.bf16.msra.mxu0 %v1389
    %2029 = vmatprep.subr.bf16.mxu0 %v1396
    %2030 = vmatpush1.bf16.msra.mxu0 %v1395
    %2031 = vmatprep.subr.bf16.mxu0 %v1402
    %2032 = vmatpush1.bf16.msra.mxu0 %v1401
    %2033 = vmatprep.subr.bf16.mxu0 %v1408
    %2034 = vmatpush1.bf16.msra.mxu0 %v1407
    %2035 = vmatprep.subr.bf16.mxu0 %v1414
    %2036 = vmatpush1.bf16.msra.mxu0 %v1413
    %2037 = vmatprep.subr.bf16.mxu0 %v1420
    %2038 = vmatpush1.bf16.msra.mxu0 %v1419
    %2039 = vmatprep.subr.bf16.mxu0 %v1426
    %2040 = vmatpush1.bf16.msra.mxu0 %v1425
    %2041 = vmatprep.subr.bf16.mxu0 %v1432
    %2042 = vmatpush1.bf16.msra.mxu0 %v1431
    %2043 = vmatprep.subr.bf16.mxu0 %v1438
    %2044 = vmatpush1.bf16.msra.mxu0 %v1437
    %2045 = vmatprep.subr.bf16.mxu0 %v1444
    %2046 = vmatpush1.bf16.msra.mxu0 %v1443
    %2047 = vmatprep.subr.bf16.mxu0 %v1450
    %2048 = vmatpush1.bf16.msra.mxu0 %v1449
    %2049 = vmatprep.subr.bf16.mxu0 %v1456
    %2050 = vmatpush1.bf16.msra.mxu0 %v1455
    %2051 = vmatprep.subr.bf16.mxu0 %v1462
    %2052 = vmatpush1.bf16.msra.mxu0 %v1461
    %2053 = vmatprep.mubr.bf16.mxu0 %v86
    %2054 = vmatmul.mubr.bf16.gmra.mrb[0].mxu0 %v85
    %v2055 = vpop.f32.mrb[0].mxu0
    %v2056 = vadd.f32 %v2013, %v2055
    %v2057 = vpop.f32.mrb[0].mxu0
    %v2058 = vadd.f32 %v2015, %v2057
    %v2059 = vpop.f32.mrb[0].mxu0
    %v2060 = vadd.f32 %v2017, %v2059
    %v2061 = vpop.f32.mrb[0].mxu0
    %v2062 = vadd.f32 %v2019, %v2061
    %2063 = vdwg.mxu0
    %2064 = vmatprep.subr.bf16.mxu0 %v1468
    %2065 = vmatpush1.bf16.msra.mxu0 %v1467
    %2066 = vmatprep.subr.bf16.mxu0 %v1474
    %2067 = vmatpush1.bf16.msra.mxu0 %v1473
    %2068 = vmatprep.subr.bf16.mxu0 %v1480
    %2069 = vmatpush1.bf16.msra.mxu0 %v1479
    %2070 = vmatprep.subr.bf16.mxu0 %v1486
    %2071 = vmatpush1.bf16.msra.mxu0 %v1485
    %2072 = vmatprep.subr.bf16.mxu0 %v1492
    %2073 = vmatpush1.bf16.msra.mxu0 %v1491
    %2074 = vmatprep.subr.bf16.mxu0 %v1498
    %2075 = vmatpush1.bf16.msra.mxu0 %v1497
    %2076 = vmatprep.subr.bf16.mxu0 %v1504
    %2077 = vmatpush1.bf16.msra.mxu0 %v1503
    %2078 = vmatprep.subr.bf16.mxu0 %v1510
    %2079 = vmatpush1.bf16.msra.mxu0 %v1509
    %2080 = vmatprep.subr.bf16.mxu0 %v1516
    %2081 = vmatpush1.bf16.msra.mxu0 %v1515
    %2082 = vmatprep.subr.bf16.mxu0 %v1522
    %2083 = vmatpush1.bf16.msra.mxu0 %v1521
    %2084 = vmatprep.subr.bf16.mxu0 %v1528
    %2085 = vmatpush1.bf16.msra.mxu0 %v1527
    %2086 = vmatprep.subr.bf16.mxu0 %v1534
    %2087 = vmatpush1.bf16.msra.mxu0 %v1533
    %2088 = vmatprep.subr.bf16.mxu0 %v1540
    %2089 = vmatpush1.bf16.msra.mxu0 %v1539
    %2090 = vmatprep.subr.bf16.mxu0 %v1546
    %2091 = vmatpush1.bf16.msra.mxu0 %v1545
    %2092 = vmatprep.subr.bf16.mxu0 %v1552
    %2093 = vmatpush1.bf16.msra.mxu0 %v1551
    %2094 = vmatprep.subr.bf16.mxu0 %v1558
    %2095 = vmatpush1.bf16.msra.mxu0 %v1557
    %2096 = vmatprep.mubr.bf16.mxu0 %v88
    %2097 = vmatmul.mubr.bf16.gmra.mrb[0].mxu0 %v87
    %v2098 = vpop.f32.mrb[0].mxu0
    %v2099 = vadd.f32 %v2056, %v2098
    %v2100 = vpop.f32.mrb[0].mxu0
    %v2101 = vadd.f32 %v2058, %v2100
    %v2102 = vpop.f32.mrb[0].mxu0
    %v2103 = vadd.f32 %v2060, %v2102
    %v2104 = vpop.f32.mrb[0].mxu0
    %v2105 = vadd.f32 %v2062, %v2104
    %2106 = vdwg.mxu0
    %2107 = vmatprep.subr.bf16.mxu0 %v1278
    %2108 = vmatpush1.bf16.msra.mxu0 %v1277
    %2109 = vmatprep.subr.bf16.mxu0 %v1284
    %2110 = vmatpush1.bf16.msra.mxu0 %v1283
    %2111 = vmatprep.subr.bf16.mxu0 %v1290
    %2112 = vmatpush1.bf16.msra.mxu0 %v1289
    %2113 = vmatprep.subr.bf16.mxu0 %v1296
    %2114 = vmatpush1.bf16.msra.mxu0 %v1295
    %2115 = vmatprep.subr.bf16.mxu0 %v1302
    %2116 = vmatpush1.bf16.msra.mxu0 %v1301
    %2117 = vmatprep.subr.bf16.mxu0 %v1308
    %2118 = vmatpush1.bf16.msra.mxu0 %v1307
    %2119 = vmatprep.subr.bf16.mxu0 %v1314
    %2120 = vmatpush1.bf16.msra.mxu0 %v1313
    %2121 = vmatprep.subr.bf16.mxu0 %v1320
    %2122 = vmatpush1.bf16.msra.mxu0 %v1319
    %2123 = vmatprep.subr.bf16.mxu0 %v1326
    %2124 = vmatpush1.bf16.msra.mxu0 %v1325
    %2125 = vmatprep.subr.bf16.mxu0 %v1332
    %2126 = vmatpush1.bf16.msra.mxu0 %v1331
    %2127 = vmatprep.subr.bf16.mxu0 %v1338
    %2128 = vmatpush1.bf16.msra.mxu0 %v1337
    %2129 = vmatprep.subr.bf16.mxu0 %v1344
    %2130 = vmatpush1.bf16.msra.mxu0 %v1343
    %2131 = vmatprep.subr.bf16.mxu0 %v1350
    %2132 = vmatpush1.bf16.msra.mxu0 %v1349
    %2133 = vmatprep.subr.bf16.mxu0 %v1356
    %2134 = vmatpush1.bf16.msra.mxu0 %v1355
    %2135 = vmatprep.subr.bf16.mxu0 %v1362
    %2136 = vmatpush1.bf16.msra.mxu0 %v1361
    %2137 = vmatprep.subr.bf16.mxu0 %v1368
    %2138 = vmatpush1.bf16.msra.mxu0 %v1367
    %2139 = vmatprep.mubr.bf16.mxu0 %v84
    %2140 = vmatmul.mubr.bf16.gmra.mrb[0].mxu0 %v83
    %v2141 = vpop.f32.mrb[0].mxu0
    %v2142 = vadd.f32 %v398, %v2141
    %v2143 = vpop.f32.mrb[0].mxu0
    %v2144 = vadd.f32 %v402, %v2143
    %v2145 = vpop.f32.mrb[0].mxu0
    %v2146 = vadd.f32 %v398, %v2145
    %v2147 = vpop.f32.mrb[0].mxu0
    %v2148 = vadd.f32 %v402, %v2147
    %2149 = vdwg.mxu0
    %2150 = vmatprep.subr.bf16.mxu0 %v1374
    %2151 = vmatpush1.bf16.msra.mxu0 %v1373
    %2152 = vmatprep.subr.bf16.mxu0 %v1380
    %2153 = vmatpush1.bf16.msra.mxu0 %v1379
    %2154 = vmatprep.subr.bf16.mxu0 %v1386
    %2155 = vmatpush1.bf16.msra.mxu0 %v1385
    %2156 = vmatprep.subr.bf16.mxu0 %v1392
    %2157 = vmatpush1.bf16.msra.mxu0 %v1391
    %2158 = vmatprep.subr.bf16.mxu0 %v1398
    %2159 = vmatpush1.bf16.msra.mxu0 %v1397
    %2160 = vmatprep.subr.bf16.mxu0 %v1404
    %2161 = vmatpush1.bf16.msra.mxu0 %v1403
    %2162 = vmatprep.subr.bf16.mxu0 %v1410
    %2163 = vmatpush1.bf16.msra.mxu0 %v1409
    %2164 = vmatprep.subr.bf16.mxu0 %v1416
    %2165 = vmatpush1.bf16.msra.mxu0 %v1415
    %2166 = vmatprep.subr.bf16.mxu0 %v1422
    %2167 = vmatpush1.bf16.msra.mxu0 %v1421
    %2168 = vmatprep.subr.bf16.mxu0 %v1428
    %2169 = vmatpush1.bf16.msra.mxu0 %v1427
    %2170 = vmatprep.subr.bf16.mxu0 %v1434
    %2171 = vmatpush1.bf16.msra.mxu0 %v1433
    %2172 = vmatprep.subr.bf16.mxu0 %v1440
    %2173 = vmatpush1.bf16.msra.mxu0 %v1439
    %2174 = vmatprep.subr.bf16.mxu0 %v1446
    %2175 = vmatpush1.bf16.msra.mxu0 %v1445
    %2176 = vmatprep.subr.bf16.mxu0 %v1452
    %2177 = vmatpush1.bf16.msra.mxu0 %v1451
    %2178 = vmatprep.subr.bf16.mxu0 %v1458
    %2179 = vmatpush1.bf16.msra.mxu0 %v1457
    %2180 = vmatprep.subr.bf16.mxu0 %v1464
    %2181 = vmatpush1.bf16.msra.mxu0 %v1463
    %2182 = vmatprep.mubr.bf16.mxu0 %v86
    %2183 = vmatmul.mubr.bf16.gmra.mrb[0].mxu0 %v85
    %v2184 = vpop.f32.mrb[0].mxu0
    %v2185 = vadd.f32 %v2142, %v2184
    %v2186 = vpop.f32.mrb[0].mxu0
    %v2187 = vadd.f32 %v2144, %v2186
    %v2188 = vpop.f32.mrb[0].mxu0
    %v2189 = vadd.f32 %v2146, %v2188
    %v2190 = vpop.f32.mrb[0].mxu0
    %v2191 = vadd.f32 %v2148, %v2190
    %2192 = vdwg.mxu0
    %2193 = vmatprep.subr.bf16.mxu0 %v1470
    %2194 = vmatpush1.bf16.msra.mxu0 %v1469
    %2195 = vmatprep.subr.bf16.mxu0 %v1476
    %2196 = vmatpush1.bf16.msra.mxu0 %v1475
    %2197 = vmatprep.subr.bf16.mxu0 %v1482
    %2198 = vmatpush1.bf16.msra.mxu0 %v1481
    %2199 = vmatprep.subr.bf16.mxu0 %v1488
    %2200 = vmatpush1.bf16.msra.mxu0 %v1487
    %2201 = vmatprep.subr.bf16.mxu0 %v1494
    %2202 = vmatpush1.bf16.msra.mxu0 %v1493
    %2203 = vmatprep.subr.bf16.mxu0 %v1500
    %2204 = vmatpush1.bf16.msra.mxu0 %v1499
    %2205 = vmatprep.subr.bf16.mxu0 %v1506
    %2206 = vmatpush1.bf16.msra.mxu0 %v1505
    %2207 = vmatprep.subr.bf16.mxu0 %v1512
    %2208 = vmatpush1.bf16.msra.mxu0 %v1511
    %2209 = vmatprep.subr.bf16.mxu0 %v1518
    %2210 = vmatpush1.bf16.msra.mxu0 %v1517
    %2211 = vmatprep.subr.bf16.mxu0 %v1524
    %2212 = vmatpush1.bf16.msra.mxu0 %v1523
    %2213 = vmatprep.subr.bf16.mxu0 %v1530
    %2214 = vmatpush1.bf16.msra.mxu0 %v1529
    %2215 = vmatprep.subr.bf16.mxu0 %v1536
    %2216 = vmatpush1.bf16.msra.mxu0 %v1535
    %2217 = vmatprep.subr.bf16.mxu0 %v1542
    %2218 = vmatpush1.bf16.msra.mxu0 %v1541
    %2219 = vmatprep.subr.bf16.mxu0 %v1548
    %2220 = vmatpush1.bf16.msra.mxu0 %v1547
    %2221 = vmatprep.subr.bf16.mxu0 %v1554
    %2222 = vmatpush1.bf16.msra.mxu0 %v1553
    %2223 = vmatprep.subr.bf16.mxu0 %v1560
    %2224 = vmatpush1.bf16.msra.mxu0 %v1559
    %2225 = vmatprep.mubr.bf16.mxu0 %v88
    %2226 = vmatmul.mubr.bf16.gmra.mrb[0].mxu0 %v87
    %v2227 = vpop.f32.mrb[0].mxu0
    %v2228 = vadd.f32 %v2185, %v2227
    %v2229 = vpop.f32.mrb[0].mxu0
    %v2230 = vadd.f32 %v2187, %v2229
    %v2231 = vpop.f32.mrb[0].mxu0
    %v2232 = vadd.f32 %v2189, %v2231
    %v2233 = vpop.f32.mrb[0].mxu0
    %v2234 = vadd.f32 %v2191, %v2233
    %2235 = vdwg.mxu0
    %v2236 = vld [vmem:[#allocation8] sm:$0xff]
    %v2237 = vld [vmem:[#allocation8 + $0x8] sm:$0xff]
    %v2238 = vld [vmem:[#allocation8 + $0x10] sm:$0xff]
    %v2239 = vld [vmem:[#allocation8 + $0x18] sm:$0xff]
    %v2240 = vld [vmem:[#allocation8 + $0x20] sm:$0xff]
    %v2241 = vld [vmem:[#allocation8 + $0x28] sm:$0xff]
    %v2242 = vld [vmem:[#allocation8 + $0x30] sm:$0xff]
    %v2243 = vld [vmem:[#allocation8 + $0x38] sm:$0xff]
    %v2244 = vld [vmem:[#allocation8 + $0x40] sm:$0xff]
    %v2245 = vld [vmem:[#allocation8 + $0x48] sm:$0xff]
    %v2246 = vld [vmem:[#allocation8 + $0x50] sm:$0xff]
    %v2247 = vld [vmem:[#allocation8 + $0x58] sm:$0xff]
    %v2248 = vadd.f32 %v1970, %v2236
    %v2249 = vadd.f32 %v1972, %v2237
    %v2250 = vadd.f32 %v2099, %v2238
    %v2251 = vadd.f32 %v2101, %v2239
    %v2252 = vadd.f32 %v2228, %v2240
    %v2253 = vadd.f32 %v2230, %v2241
    %v2254 = vadd.f32 %v1974, %v2242
    %v2255 = vadd.f32 %v1976, %v2243
    %v2256 = vadd.f32 %v2103, %v2244
    %v2257 = vadd.f32 %v2105, %v2245
    %v2258 = vadd.f32 %v2232, %v2246
    %v2259 = vadd.f32 %v2234, %v2247
    %v2260 = vmax.f32 %v2248, 0.0
    %v2261 = vmax.f32 %v2249, 0.0
    %v2262 = vmax.f32 %v2250, 0.0
    %v2263 = vmax.f32 %v2251, 0.0
    %v2264 = vmax.f32 %v2252, 0.0
    %v2265 = vmax.f32 %v2253, 0.0
    %v2266 = vmax.f32 %v2254, 0.0
    %v2267 = vmax.f32 %v2255, 0.0
    %v2268 = vmax.f32 %v2256, 0.0
    %v2269 = vmax.f32 %v2257, 0.0
    %v2270 = vmax.f32 %v2258, 0.0
    %v2271 = vmax.f32 %v2259, 0.0
    %2272 = vst [vmem:[#allocation10] sm:$0xff] %v2260
    %2273 = vst [vmem:[#allocation10 + $0x8] sm:$0xff] %v2261
    %2274 = vst [vmem:[#allocation10 + $0x10] sm:$0xff] %v2262
    %2275 = vst [vmem:[#allocation10 + $0x18] sm:$0xff] %v2263
    %2276 = vst [vmem:[#allocation10 + $0x20] sm:$0xff] %v2264
    %2277 = vst [vmem:[#allocation10 + $0x28] sm:$0xff] %v2265
    %2278 = vst [vmem:[#allocation10 + $0x30] sm:$0xff] %v2266
    %2279 = vst [vmem:[#allocation10 + $0x38] sm:$0xff] %v2267
    %2280 = vst [vmem:[#allocation10 + $0x40] sm:$0xff] %v2268
    %2281 = vst [vmem:[#allocation10 + $0x48] sm:$0xff] %v2269
    %2282 = vst [vmem:[#allocation10 + $0x50] sm:$0xff] %v2270
    %2283 = vst [vmem:[#allocation10 + $0x58] sm:$0xff] %v2271
    // Predicated region
    $region34: #{tpu_custom_call.1} parent=1 // pred_check
      _
    $region35: #{tpu_custom_call.1} parent=1 // pred_check_branch
      %2285 = sbr.rel (0) target = $region37
    $region36: #{tpu_custom_call.1} parent=1 // pred_region
      %s2287 = ssub.s32 1536, 1536
      %2288 = vsyncadd [#allocation4], %s2287
      %s2289 = sshll.u32 [#allocation10], 4
      %s2290 = int_to_ptr.vmem [resolvable:$true] %s2289
      %2295 = dma.vmem_to_hbm [thread:$0]  %s2290, 1536, %s4, [#allocation4], 768, 768, 48
    $region37: #{tpu_custom_call.1} parent=1 // pred_fallthru
      _
    // Predicated region
    $region38: #{tpu_custom_call.1} parent=1 // pred_check
      _
    $region39: #{tpu_custom_call.1} parent=1 // pred_check_branch
      %2297 = sbr.rel (0) target = $region41
    $region40: #{tpu_custom_call.1} parent=1 // pred_region
      %2298 = dma.done [#allocation4], 1536
    $region41: #{tpu_custom_call.1} parent=1 // pred_fallthru
      _
    %2299 = vsyncpa [#allocation3], 1
    %2300 = vsyncpa [#allocation6], 1
    %2301 = vsyncpa [#allocation9], 1
    %2302 = vsyncpa [#allocation4], 1

</llo_original>
